<compile_context>
chip_gen: v5e
topology: v5e:2x2
jax: 0.10.0
libtpu: 0.0.40
codegen_flags: <defaults>
</compile_context>

<pallas_src>
import functools

import jax
import jax.numpy as jnp
from jax.experimental import pallas as pl
from jax.experimental.pallas import tpu as pltpu

_BN_EPS = 1e-5


# --------------------------------------------------------------------------
# Fused projector (Linear->BN->ReLU)* -> Linear -> BN -> correlation -> loss
# --------------------------------------------------------------------------
def _barlow_twins_fused_kernel(*refs, n_hidden, batch, batch_size, lambd, eps):
    """Fully fused BarlowTwins forward (all operands VMEM-resident).

    refs = (y_ref,                        # [2B, K]  bf16; view1 rows [:B], view2 rows [B:]
            (w_l, g_l, b_l) * n_hidden,   # hidden Linear(bias=False) + BN(affine) + ReLU
            w_final,                      # [H, D]   bf16 final Linear(bias=False)
            o_ref)                        # [1, 1]   f32 loss
    """
    y_ref = refs[0]
    o_ref = refs[-1]
    w_final_ref = refs[-2]
    hidden_refs = refs[1:1 + 3 * n_hidden]

    B = batch

    def _bn_stats(x):
        # Training-mode BatchNorm1d (biased variance), affine-free, f32.
        mean = jnp.mean(x, axis=0, keepdims=True)
        var = jnp.mean(jnp.square(x - mean), axis=0, keepdims=True)
        return (x - mean) * jax.lax.rsqrt(var + eps)

    def _bn_per_view(x, gamma, beta):
        # x: [2B, F] f32 holding both views stacked on the batch axis.
        # BN statistics must be computed per view (per half), not over 2B rows,
        # so use masked sublane reductions (no concat / data movement needed).
        in_v1 = jax.lax.broadcasted_iota(jnp.int32, x.shape, 0) < B
        inv_b = jnp.float32(1.0 / B)
        m1 = jnp.sum(jnp.where(in_v1, x, 0.0), axis=0, keepdims=True) * inv_b
        m2 = jnp.sum(jnp.where(in_v1, 0.0, x), axis=0, keepdims=True) * inv_b
        d = x - jnp.where(in_v1, m1, m2)
        d2 = d * d
        v1 = jnp.sum(jnp.where(in_v1, d2, 0.0), axis=0, keepdims=True) * inv_b
        v2 = jnp.sum(jnp.where(in_v1, 0.0, d2), axis=0, keepdims=True) * inv_b
        xn = d * jax.lax.rsqrt(jnp.where(in_v1, v1, v2) + eps)
        return xn * gamma + beta

    # ---- projector: (Linear(no bias) -> BN -> ReLU)^n_hidden -> Linear(no bias)
    act = y_ref[...]                                            # bf16 [2B, K]
    for l in range(n_hidden):
        w_ref, g_ref, b_ref = hidden_refs[3 * l:3 * l + 3]
        h = jnp.dot(act, w_ref[...], preferred_element_type=jnp.float32)
        h = jnp.maximum(_bn_per_view(h, g_ref[...], b_ref[...]), 0.0)
        act = h.astype(jnp.bfloat16)                            # bf16 feeds next MXU op

    z = jnp.dot(act, w_final_ref[...],
                preferred_element_type=jnp.float32)             # [2B, D] f32

    # ---- self.bn (affine-free, training-mode) per view, then cross-correlation
    z1n = _bn_stats(z[:B])                                      # [B, D] f32
    z2n = _bn_stats(z[B:])
    # c = bn(z1).T @ bn(z2) / batch_size : contract the batch axis on the MXU
    # (no explicit transpose); kept in f32 for the (diag(c) - 1)^2 term.
    c = jax.lax.dot_general(
        z1n, z2n, dimension_numbers=(((0,), (0,)), ((), ())),
        preferred_element_type=jnp.float32) * jnp.float32(1.0 / batch_size)
    # TODO(synk): torch.distributed.all_reduce(c) is identity on a single
    # device; a sharded version would psum the c tiles across devices here.

    gi = jax.lax.broadcasted_iota(jnp.int32, c.shape, 0)
    gj = jax.lax.broadcasted_iota(jnp.int32, c.shape, 1)
    is_diag = gi == gj
    on_diag = jnp.sum(jnp.where(is_diag, jnp.square(c - 1.0), 0.0))
    off_diag = jnp.sum(jnp.where(is_diag, 0.0, c * c))
    o_ref[...] = jnp.zeros_like(o_ref) + (on_diag + jnp.float32(lambd) * off_diag)


def barlow_twins_forward(y1, y2, hidden_params, w_final_t, *, batch_size, lambd,
                         eps=_BN_EPS):
    """Fused BarlowTwins forward.

    y1, y2:        [B, K] backbone features for the two views.
    hidden_params: list of (w_t [K_l, H_l], gamma [H_l], beta [H_l]), one per
                   Linear(bias=False)+BatchNorm1d+ReLU block of the projector.
    w_final_t:     [H_last, D] pre-transposed weight of the final Linear.
    """
    B, K = y1.shape
    assert y2.shape == (B, K)

    # Both views in one call: stacked on the batch axis so every weight is
    # DMA'd from HBM exactly once; MXU inputs cast to bf16 on the host.
    y = jnp.concatenate([y1, y2], axis=0).astype(jnp.bfloat16)   # [2B, K]

    args = [y]
    in_specs = [pl.BlockSpec((2 * B, K), lambda i: (0, 0))]

    def _add(arr):
        args.append(arr)
        in_specs.append(pl.BlockSpec(arr.shape, lambda i: (0, 0)))

    for (w_t, g, b) in hidden_params:
        _add(jnp.asarray(w_t, jnp.bfloat16))
        _add(jnp.asarray(g, jnp.float32).reshape(1, -1))
        _add(jnp.asarray(b, jnp.float32).reshape(1, -1))
    _add(jnp.asarray(w_final_t, jnp.bfloat16))

    kernel = functools.partial(
        _barlow_twins_fused_kernel,
        n_hidden=len(hidden_params), batch=B,
        batch_size=float(batch_size), lambd=float(lambd), eps=eps)

    out = pl.pallas_call(
        kernel,
        out_shape=jax.ShapeDtypeStruct((1, 1), jnp.float32),
        grid=(1,),
        in_specs=in_specs,
        out_specs=pl.BlockSpec((1, 1), lambda i: (0, 0)),
        compiler_params=pltpu.CompilerParams(
            dimension_semantics=("arbitrary",)),
    )(*args)
    return out[0, 0]


if __name__ == "__main__":
    key = jax.random.PRNGKey(0)
    B = 8                 # batch (sublane-aligned)
    in_dim = 2048         # backbone feature dim hard-coded in the module
    hidden = 256          # small projector: args.projector = "256-128"
    out_dim = 128
    lambd = 0.0051

    k1, k2, k3, k4 = jax.random.split(key, 4)
    y1 = jax.random.normal(k1, (B, in_dim), jnp.float32)
    y2 = jax.random.normal(k2, (B, in_dim), jnp.float32)
    # PyTorch Linear weights are [out, in]; pre-transpose to [in, out] for x @ W^T.
    w1_t = (jax.random.normal(k3, (hidden, in_dim), jnp.float32) * (in_dim ** -0.5)).T
    w2_t = (jax.random.normal(k4, (out_dim, hidden), jnp.float32) * (hidden ** -0.5)).T
    g1 = jnp.ones((hidden,), jnp.float32)   # BN weight init
    b1 = jnp.zeros((hidden,), jnp.float32)  # BN bias init

    loss = barlow_twins_forward(y1, y2, [(w1_t, g1, b1)], w2_t,
                                batch_size=B, lambd=lambd)
    jax.block_until_ready(loss)

    # ---- pure-JAX reference (mirrors the kernel's bf16 MXU inputs, f32 acc) ----
    hp = jax.lax.Precision.HIGHEST

    def _bf16(x):
        return x.astype(jnp.bfloat16).astype(jnp.float32)

    def _bn(x, gamma=None, beta=None, eps=_BN_EPS):
        mean = jnp.mean(x, axis=0, keepdims=True)
        var = jnp.mean(jnp.square(x - mean), axis=0, keepdims=True)
        xn = (x - mean) / jnp.sqrt(var + eps)
        if gamma is not None:
            xn = xn * gamma + beta
        return xn

    def _proj(y):
        h = jnp.maximum(_bn(jnp.dot(_bf16(y), _bf16(w1_t), precision=hp), g1, b1), 0.0)
        return _bn(jnp.dot(_bf16(h), _bf16(w2_t), precision=hp))

    z1r, z2r = _proj(y1), _proj(y2)
    c = jnp.dot(z1r.T, z2r, precision=hp) / B
    on = jnp.sum(jnp.square(jnp.diag(c) - 1.0))
    off = jnp.sum(c * c) - jnp.sum(jnp.square(jnp.diag(c)))
    ref = on + lambd * off

    assert jnp.allclose(loss, ref, rtol=2e-2, atol=2e-2), (loss, ref)
    print("KERNEL_OK")
</pallas_src>

<mosaic_0001>
module attributes {stable_mosaic.version = 11 : i64} {
  func.func @_barlow_twins_fused_kernel(%arg0: i32, %arg1: memref<16x2048xbf16, #tpu.memory_space<vmem>>, %arg2: memref<2048x256xbf16, #tpu.memory_space<vmem>>, %arg3: memref<1x256xf32, #tpu.memory_space<vmem>>, %arg4: memref<1x256xf32, #tpu.memory_space<vmem>>, %arg5: memref<256x128xbf16, #tpu.memory_space<vmem>>, %arg6: memref<1x1xf32, #tpu.memory_space<vmem>>) attributes {dimension_semantics = [#tpu.dimension_semantics<arbitrary>], iteration_bounds = array<i64: 1>, scalar_prefetch = 0 : i64, scratch_operands = 0 : i64, tpu.core_type = #tpu.core_type<tc>, window_params = [{pipeline_mode = #tpu.pipeline_mode<synchronous>, transform_indices = @transform_0, window_bounds = array<i64: 16, 2048>}, {pipeline_mode = #tpu.pipeline_mode<synchronous>, transform_indices = @transform_1, window_bounds = array<i64: 2048, 256>}, {pipeline_mode = #tpu.pipeline_mode<synchronous>, transform_indices = @transform_2, window_bounds = array<i64: 1, 256>}, {pipeline_mode = #tpu.pipeline_mode<synchronous>, transform_indices = @transform_3, window_bounds = array<i64: 1, 256>}, {pipeline_mode = #tpu.pipeline_mode<synchronous>, transform_indices = @transform_4, window_bounds = array<i64: 256, 128>}, {pipeline_mode = #tpu.pipeline_mode<synchronous>, transform_indices = @transform_5, window_bounds = array<i64: 1, 1>}]} {
    %c0 = arith.constant 0 : index
    %c0_0 = arith.constant 0 : index
    %0 = vector.load %arg1[%c0, %c0_0] : memref<16x2048xbf16, #tpu.memory_space<vmem>>, vector<16x2048xbf16>
    %c0_1 = arith.constant 0 : index
    %c0_2 = arith.constant 0 : index
    %1 = vector.load %arg2[%c0_1, %c0_2] : memref<2048x256xbf16, #tpu.memory_space<vmem>>, vector<2048x256xbf16>
    %cst = arith.constant dense<0.000000e+00> : vector<16x256xf32>
    %2 = tpu.matmul %0, %1, %cst {dimension_numbers = #tpu.dot_dimension_numbers<[1], [0], [0], [1], [0, 0, 1, 1], [], []>} : vector<16x2048xbf16>, vector<2048x256xbf16>, vector<16x256xf32> -> vector<16x256xf32>
    %c0_3 = arith.constant 0 : index
    %c0_4 = arith.constant 0 : index
    %3 = vector.load %arg3[%c0_3, %c0_4] : memref<1x256xf32, #tpu.memory_space<vmem>>, vector<1x256xf32>
    %c0_5 = arith.constant 0 : index
    %c0_6 = arith.constant 0 : index
    %4 = vector.load %arg4[%c0_5, %c0_6] : memref<1x256xf32, #tpu.memory_space<vmem>>, vector<1x256xf32>
    %5 = tpu.iota {dimensions = array<i32: 0>} : vector<16x256xi32>
    %c8_i32 = arith.constant 8 : i32
    %6 = vector.broadcast %c8_i32 : i32 to vector<16x256xi32>
    %7 = arith.cmpi slt, %5, %6 : vector<16x256xi32>
    %cst_7 = arith.constant 0.000000e+00 : f32
    %8 = vector.broadcast %cst_7 : f32 to vector<16x256xf32>
    %9 = arith.select %7, %2, %8 : vector<16x256xi1>, vector<16x256xf32>
    %cst_8 = arith.constant dense<0.000000e+00> : vector<256xf32>
    %10 = vector.multi_reduction <add>, %9, %cst_8 [0] : vector<16x256xf32> to vector<256xf32>
    %11 = vector.shape_cast %10 : vector<256xf32> to vector<1x256xf32>
    %cst_9 = arith.constant 1.250000e-01 : f32
    %12 = vector.broadcast %cst_9 : f32 to vector<1x256xf32>
    %13 = arith.mulf %11, %12 : vector<1x256xf32>
    %cst_10 = arith.constant 0.000000e+00 : f32
    %14 = vector.broadcast %cst_10 : f32 to vector<16x256xf32>
    %15 = arith.select %7, %14, %2 : vector<16x256xi1>, vector<16x256xf32>
    %cst_11 = arith.constant dense<0.000000e+00> : vector<256xf32>
    %16 = vector.multi_reduction <add>, %15, %cst_11 [0] : vector<16x256xf32> to vector<256xf32>
    %17 = vector.shape_cast %16 : vector<256xf32> to vector<1x256xf32>
    %cst_12 = arith.constant 1.250000e-01 : f32
    %18 = vector.broadcast %cst_12 : f32 to vector<1x256xf32>
    %19 = arith.mulf %17, %18 : vector<1x256xf32>
    %20 = vector.shape_cast %13 : vector<1x256xf32> to vector<1x256xf32>
    %21 = vector.broadcast %20 : vector<1x256xf32> to vector<16x256xf32>
    %22 = vector.shape_cast %19 : vector<1x256xf32> to vector<1x256xf32>
    %23 = vector.broadcast %22 : vector<1x256xf32> to vector<16x256xf32>
    %24 = arith.select %7, %21, %23 : vector<16x256xi1>, vector<16x256xf32>
    %25 = arith.subf %2, %24 : vector<16x256xf32>
    %26 = arith.mulf %25, %25 : vector<16x256xf32>
    %cst_13 = arith.constant 0.000000e+00 : f32
    %27 = vector.broadcast %cst_13 : f32 to vector<16x256xf32>
    %28 = arith.select %7, %26, %27 : vector<16x256xi1>, vector<16x256xf32>
    %cst_14 = arith.constant dense<0.000000e+00> : vector<256xf32>
    %29 = vector.multi_reduction <add>, %28, %cst_14 [0] : vector<16x256xf32> to vector<256xf32>
    %30 = vector.shape_cast %29 : vector<256xf32> to vector<1x256xf32>
    %cst_15 = arith.constant 1.250000e-01 : f32
    %31 = vector.broadcast %cst_15 : f32 to vector<1x256xf32>
    %32 = arith.mulf %30, %31 : vector<1x256xf32>
    %cst_16 = arith.constant 0.000000e+00 : f32
    %33 = vector.broadcast %cst_16 : f32 to vector<16x256xf32>
    %34 = arith.select %7, %33, %26 : vector<16x256xi1>, vector<16x256xf32>
    %cst_17 = arith.constant dense<0.000000e+00> : vector<256xf32>
    %35 = vector.multi_reduction <add>, %34, %cst_17 [0] : vector<16x256xf32> to vector<256xf32>
    %36 = vector.shape_cast %35 : vector<256xf32> to vector<1x256xf32>
    %cst_18 = arith.constant 1.250000e-01 : f32
    %37 = vector.broadcast %cst_18 : f32 to vector<1x256xf32>
    %38 = arith.mulf %36, %37 : vector<1x256xf32>
    %39 = vector.shape_cast %32 : vector<1x256xf32> to vector<1x256xf32>
    %40 = vector.broadcast %39 : vector<1x256xf32> to vector<16x256xf32>
    %41 = vector.shape_cast %38 : vector<1x256xf32> to vector<1x256xf32>
    %42 = vector.broadcast %41 : vector<1x256xf32> to vector<16x256xf32>
    %43 = arith.select %7, %40, %42 : vector<16x256xi1>, vector<16x256xf32>
    %cst_19 = arith.constant 9.99999974E-6 : f32
    %44 = vector.broadcast %cst_19 : f32 to vector<16x256xf32>
    %45 = arith.addf %43, %44 : vector<16x256xf32>
    %46 = math.rsqrt %45 : vector<16x256xf32>
    %47 = arith.mulf %25, %46 : vector<16x256xf32>
    %48 = vector.broadcast %3 : vector<1x256xf32> to vector<16x256xf32>
    %49 = arith.mulf %47, %48 : vector<16x256xf32>
    %50 = vector.broadcast %4 : vector<1x256xf32> to vector<16x256xf32>
    %51 = arith.addf %49, %50 : vector<16x256xf32>
    %cst_20 = arith.constant 0.000000e+00 : f32
    %52 = vector.broadcast %cst_20 : f32 to vector<16x256xf32>
    %53 = arith.maximumf %51, %52 : vector<16x256xf32>
    %54 = arith.truncf %53 : vector<16x256xf32> to vector<16x256xbf16>
    %c0_21 = arith.constant 0 : index
    %c0_22 = arith.constant 0 : index
    %55 = vector.load %arg5[%c0_21, %c0_22] : memref<256x128xbf16, #tpu.memory_space<vmem>>, vector<256x128xbf16>
    %cst_23 = arith.constant dense<0.000000e+00> : vector<16x128xf32>
    %56 = tpu.matmul %54, %55, %cst_23 {dimension_numbers = #tpu.dot_dimension_numbers<[1], [0], [0], [1], [0, 0, 1, 1], [], []>} : vector<16x256xbf16>, vector<256x128xbf16>, vector<16x128xf32> -> vector<16x128xf32>
    %57 = vector.extract_strided_slice %56 {offsets = [0, 0], sizes = [8, 128], strides = [1, 1]} : vector<16x128xf32> to vector<8x128xf32>
    %cst_24 = arith.constant dense<0.000000e+00> : vector<128xf32>
    %58 = vector.multi_reduction <add>, %57, %cst_24 [0] : vector<8x128xf32> to vector<128xf32>
    %59 = vector.shape_cast %58 : vector<128xf32> to vector<1x128xf32>
    %cst_25 = arith.constant 8.000000e+00 : f32
    %60 = vector.broadcast %cst_25 : f32 to vector<1x128xf32>
    %61 = arith.divf %59, %60 : vector<1x128xf32>
    %62 = vector.broadcast %61 : vector<1x128xf32> to vector<8x128xf32>
    %63 = arith.subf %57, %62 : vector<8x128xf32>
    %64 = arith.mulf %63, %63 : vector<8x128xf32>
    %cst_26 = arith.constant dense<0.000000e+00> : vector<128xf32>
    %65 = vector.multi_reduction <add>, %64, %cst_26 [0] : vector<8x128xf32> to vector<128xf32>
    %66 = vector.shape_cast %65 : vector<128xf32> to vector<1x128xf32>
    %cst_27 = arith.constant 8.000000e+00 : f32
    %67 = vector.broadcast %cst_27 : f32 to vector<1x128xf32>
    %68 = arith.divf %66, %67 : vector<1x128xf32>
    %69 = vector.broadcast %61 : vector<1x128xf32> to vector<8x128xf32>
    %70 = arith.subf %57, %69 : vector<8x128xf32>
    %cst_28 = arith.constant 9.99999974E-6 : f32
    %71 = vector.broadcast %cst_28 : f32 to vector<1x128xf32>
    %72 = arith.addf %68, %71 : vector<1x128xf32>
    %73 = math.rsqrt %72 : vector<1x128xf32>
    %74 = vector.broadcast %73 : vector<1x128xf32> to vector<8x128xf32>
    %75 = arith.mulf %70, %74 : vector<8x128xf32>
    %76 = vector.extract_strided_slice %56 {offsets = [8, 0], sizes = [8, 128], strides = [1, 1]} : vector<16x128xf32> to vector<8x128xf32>
    %cst_29 = arith.constant dense<0.000000e+00> : vector<128xf32>
    %77 = vector.multi_reduction <add>, %76, %cst_29 [0] : vector<8x128xf32> to vector<128xf32>
    %78 = vector.shape_cast %77 : vector<128xf32> to vector<1x128xf32>
    %cst_30 = arith.constant 8.000000e+00 : f32
    %79 = vector.broadcast %cst_30 : f32 to vector<1x128xf32>
    %80 = arith.divf %78, %79 : vector<1x128xf32>
    %81 = vector.broadcast %80 : vector<1x128xf32> to vector<8x128xf32>
    %82 = arith.subf %76, %81 : vector<8x128xf32>
    %83 = arith.mulf %82, %82 : vector<8x128xf32>
    %cst_31 = arith.constant dense<0.000000e+00> : vector<128xf32>
    %84 = vector.multi_reduction <add>, %83, %cst_31 [0] : vector<8x128xf32> to vector<128xf32>
    %85 = vector.shape_cast %84 : vector<128xf32> to vector<1x128xf32>
    %cst_32 = arith.constant 8.000000e+00 : f32
    %86 = vector.broadcast %cst_32 : f32 to vector<1x128xf32>
    %87 = arith.divf %85, %86 : vector<1x128xf32>
    %88 = vector.broadcast %80 : vector<1x128xf32> to vector<8x128xf32>
    %89 = arith.subf %76, %88 : vector<8x128xf32>
    %cst_33 = arith.constant 9.99999974E-6 : f32
    %90 = vector.broadcast %cst_33 : f32 to vector<1x128xf32>
    %91 = arith.addf %87, %90 : vector<1x128xf32>
    %92 = math.rsqrt %91 : vector<1x128xf32>
    %93 = vector.broadcast %92 : vector<1x128xf32> to vector<8x128xf32>
    %94 = arith.mulf %89, %93 : vector<8x128xf32>
    %cst_34 = arith.constant dense<0.000000e+00> : vector<128x128xf32>
    %95 = tpu.matmul %75, %94, %cst_34 {dimension_numbers = #tpu.dot_dimension_numbers<[0], [0], [1], [1], [0, 1, 1, 1], [], []>} : vector<8x128xf32>, vector<8x128xf32>, vector<128x128xf32> -> vector<128x128xf32>
    %cst_35 = arith.constant 1.250000e-01 : f32
    %96 = vector.broadcast %cst_35 : f32 to vector<128x128xf32>
    %97 = arith.mulf %95, %96 : vector<128x128xf32>
    %98 = tpu.iota {dimensions = array<i32: 0>} : vector<128x128xi32>
    %99 = tpu.iota {dimensions = array<i32: 1>} : vector<128x128xi32>
    %100 = arith.cmpi eq, %98, %99 : vector<128x128xi32>
    %cst_36 = arith.constant 1.000000e+00 : f32
    %101 = vector.broadcast %cst_36 : f32 to vector<128x128xf32>
    %102 = arith.subf %97, %101 : vector<128x128xf32>
    %103 = arith.mulf %102, %102 : vector<128x128xf32>
    %cst_37 = arith.constant 0.000000e+00 : f32
    %104 = vector.broadcast %cst_37 : f32 to vector<128x128xf32>
    %105 = arith.select %100, %103, %104 : vector<128x128xi1>, vector<128x128xf32>
    %106 = vector.shape_cast %105 : vector<128x128xf32> to vector<1x128x128xf32>
    %cst_38 = arith.constant dense<0.000000e+00> : vector<1xf32>
    %107 = vector.multi_reduction <add>, %106, %cst_38 [1, 2] : vector<1x128x128xf32> to vector<1xf32>
    %108 = vector.shape_cast %107 : vector<1xf32> to vector<1x1x1xf32>
    %109 = vector.extract %108[0, 0, 0] : f32 from vector<1x1x1xf32>
    %110 = arith.mulf %97, %97 : vector<128x128xf32>
    %cst_39 = arith.constant 0.000000e+00 : f32
    %111 = vector.broadcast %cst_39 : f32 to vector<128x128xf32>
    %112 = arith.select %100, %111, %110 : vector<128x128xi1>, vector<128x128xf32>
    %113 = vector.shape_cast %112 : vector<128x128xf32> to vector<1x128x128xf32>
    %cst_40 = arith.constant dense<0.000000e+00> : vector<1xf32>
    %114 = vector.multi_reduction <add>, %113, %cst_40 [1, 2] : vector<1x128x128xf32> to vector<1xf32>
    %115 = vector.shape_cast %114 : vector<1xf32> to vector<1x1x1xf32>
    %116 = vector.extract %115[0, 0, 0] : f32 from vector<1x1x1xf32>
    %cst_41 = arith.constant 0.000000e+00 : f32
    %117 = vector.broadcast %cst_41 : f32 to vector<1x1xf32>
    %cst_42 = arith.constant 5.100000e-03 : f32
    %118 = arith.mulf %cst_42, %116 : f32
    %119 = arith.addf %109, %118 : f32
    %120 = vector.broadcast %119 : f32 to vector<1x1xf32>
    %121 = arith.addf %117, %120 : vector<1x1xf32>
    %c0_43 = arith.constant 0 : index
    %c0_44 = arith.constant 0 : index
    %122 = vector.load %arg6[%c0_43, %c0_44] : memref<1x1xf32, #tpu.memory_space<vmem>>, vector<1x1xf32>
    tpu.vector_store %arg6[%c0_43, %c0_44], %121 {strides = array<i32>} : memref<1x1xf32, #tpu.memory_space<vmem>>, vector<1x1xf32>,
    return
  }
  func.func @transform_0(%arg0: i32) -> (i32, i32) {
    %c0_i32 = arith.constant 0 : i32
    %c0_i32_0 = arith.constant 0 : i32
    %c0_i32_1 = arith.constant 0 : i32
    return %c0_i32, %c0_i32_0 : i32, i32
  }
  func.func @transform_1(%arg0: i32) -> (i32, i32) {
    %c0_i32 = arith.constant 0 : i32
    %c0_i32_0 = arith.constant 0 : i32
    %c0_i32_1 = arith.constant 0 : i32
    return %c0_i32, %c0_i32_0 : i32, i32
  }
  func.func @transform_2(%arg0: i32) -> (i32, i32) {
    %c0_i32 = arith.constant 0 : i32
    %c0_i32_0 = arith.constant 0 : i32
    %c0_i32_1 = arith.constant 0 : i32
    return %c0_i32, %c0_i32_0 : i32, i32
  }
  func.func @transform_3(%arg0: i32) -> (i32, i32) {
    %c0_i32 = arith.constant 0 : i32
    %c0_i32_0 = arith.constant 0 : i32
    %c0_i32_1 = arith.constant 0 : i32
    return %c0_i32, %c0_i32_0 : i32, i32
  }
  func.func @transform_4(%arg0: i32) -> (i32, i32) {
    %c0_i32 = arith.constant 0 : i32
    %c0_i32_0 = arith.constant 0 : i32
    %c0_i32_1 = arith.constant 0 : i32
    return %c0_i32, %c0_i32_0 : i32, i32
  }
  func.func @transform_5(%arg0: i32) -> (i32, i32) {
    %c0_i32 = arith.constant 0 : i32
    %c0_i32_0 = arith.constant 0 : i32
    %c0_i32_1 = arith.constant 0 : i32
    return %c0_i32, %c0_i32_0 : i32, i32
  }
}

</mosaic_0001>

<llo_original>
// kernel: tpu_custom_call.1
$region0: #{tpu_custom_call.1}
  #allocation0 [shape = 'u32[]', space=smem, size = 0x4, offset = 0x4, fixed_abs, tag = 'smem constant byte address 0x4 - core index']
  #allocation1 [shape = 'u32[72,128]{1,0:T(1,128)}', space=vmem, size = 0x9000, scoped, tag = 'internal scratch']
  %s0 = inlined_call_operand.hbm [shape: bf16[16,2048], index: 0, kind: input, shape index: {}]
  %s1 = inlined_call_operand.hbm [shape: bf16[2048,256], index: 1, kind: input, shape index: {}]
  %s2 = inlined_call_operand.hbm [shape: f32[1,256], index: 2, kind: input, shape index: {}]
  %s3 = inlined_call_operand.vmem [shape: f32[1,256], index: 3, kind: input, shape index: {}]
  %s4 = inlined_call_operand.hbm [shape: bf16[256,128], index: 4, kind: input, shape index: {}]
  %s5 = inlined_call_operand.hbm [shape: f32[1,1], index: 5, kind: output, shape index: {}]
  %s6 = sld [smem:[#allocation0]]
  $region46: #{tpu_custom_call.1} parent=0
    _
  %s8 = ssub.s32 1, %s6
  %s9 = scalar_select 0, %s8, %s6
  $region1: #{tpu_custom_call.1} parent=0
    #allocation2 [shape = 'u8[65536]{0}', space=vmem, size = 0x10000, scoped, tag = 'input window, operand 0, single buffered']
    #allocation3 [shape = 's32[1]{0}', space=sflag, size = 0x4, scoped, tag = 'scoped memory for tpu_custom_call.1']
    #allocation4 [shape = 's32[1]{0}', space=sflag, size = 0x4, scoped, tag = 'scoped memory for tpu_custom_call.1']
    #allocation5 [shape = 'u8[1048576]{0}', space=vmem, size = 0x100000, scoped, tag = 'input window, operand 1, single buffered']
    #allocation6 [shape = 's32[1]{0}', space=sflag, size = 0x4, scoped, tag = 'scoped memory for tpu_custom_call.1']
    #allocation7 [shape = 'u8[1024]{0}', space=vmem, size = 0x400, scoped, tag = 'input window, operand 2, single buffered']
    #allocation8 [shape = 'u8[65536]{0}', space=vmem, size = 0x10000, scoped, tag = 'input window, operand 4, single buffered']
    #allocation9 [shape = 's32[1]{0}', space=sflag, size = 0x4, scoped, tag = 'scoped memory for tpu_custom_call.1']
    #allocation10 [shape = 'u8[512]{0}', space=vmem, size = 0x400, scoped, tag = 'output window, operand 0, single buffered']
    %10 = vsyncpa [#allocation3], 0
    %11 = vsyncpa [#allocation6], 0
    %12 = vsyncpa [#allocation9], 0
    %13 = vsyncpa [#allocation4], 0
    // Predicated region
    $region2: #{tpu_custom_call.1} parent=1 // pred_check
      _
    $region3: #{tpu_custom_call.1} parent=1 // pred_check_branch
      %15 = sbr.rel (0) target = $region5
    $region4: #{tpu_custom_call.1} parent=1 // pred_region
      %17 = vsyncadd [#allocation3], 0
      %s18 = sshll.u32 %s0, 4
      %s19 = int_to_ptr.hbm [resolvable:$true] %s18
      %s20 = sshll.u32 [#allocation2], 4
      %s21 = int_to_ptr.vmem [resolvable:$true] %s20
      %26 = dma.hbm_to_vmem [thread:$0]  %s19, 2048, %s21, [#allocation3], 1024, 1024, 64
    $region5: #{tpu_custom_call.1} parent=1 // pred_fallthru
      _
    // Predicated region
    $region6: #{tpu_custom_call.1} parent=1 // pred_check
      _
    $region7: #{tpu_custom_call.1} parent=1 // pred_check_branch
      %28 = sbr.rel (0) target = $region9
    $region8: #{tpu_custom_call.1} parent=1 // pred_region
      %30 = vsyncadd [#allocation6], 0
      %s31 = sshll.u32 %s1, 4
      %s32 = int_to_ptr.hbm [resolvable:$true] %s31
      %s33 = sshll.u32 [#allocation5], 4
      %s34 = int_to_ptr.vmem [resolvable:$true] %s33
      %39 = dma.hbm_to_vmem [thread:$0]  %s32, 32768, %s34, [#allocation6], 128, 128, 8
    $region9: #{tpu_custom_call.1} parent=1 // pred_fallthru
      _
    // Predicated region
    $region10: #{tpu_custom_call.1} parent=1 // pred_check
      _
    $region11: #{tpu_custom_call.1} parent=1 // pred_check_branch
      %41 = sbr.rel (0) target = $region13
    $region12: #{tpu_custom_call.1} parent=1 // pred_region
      %43 = vsyncadd [#allocation6], 0
      %s45 = sshll.u32 %s2, 4
      %s46 = int_to_ptr.hbm [resolvable:$true] %s45
      %s47 = sshll.u32 [#allocation7], 4
      %s48 = int_to_ptr.vmem [resolvable:$true] %s47
      %50 = dma.hbm_to_vmem [thread:$0]  %s46, 32, %s48, [#allocation6]
    $region13: #{tpu_custom_call.1} parent=1 // pred_fallthru
      _
    // Predicated region
    $region14: #{tpu_custom_call.1} parent=1 // pred_check
      _
    $region15: #{tpu_custom_call.1} parent=1 // pred_check_branch
      %52 = sbr.rel (0) target = $region17
    $region16: #{tpu_custom_call.1} parent=1 // pred_region
      _
    $region17: #{tpu_custom_call.1} parent=1 // pred_fallthru
      _
    // Predicated region
    $region18: #{tpu_custom_call.1} parent=1 // pred_check
      _
    $region19: #{tpu_custom_call.1} parent=1 // pred_check_branch
      %54 = sbr.rel (0) target = $region21
    $region20: #{tpu_custom_call.1} parent=1 // pred_region
      %56 = vsyncadd [#allocation9], 0
      %s57 = sshll.u32 %s4, 4
      %s58 = int_to_ptr.hbm [resolvable:$true] %s57
      %s59 = sshll.u32 [#allocation8], 4
      %s60 = int_to_ptr.vmem [resolvable:$true] %s59
      %65 = dma.hbm_to_vmem [thread:$0]  %s58, 2048, %s60, [#allocation9], 64, 64, 4
    $region21: #{tpu_custom_call.1} parent=1 // pred_fallthru
      _
    // Predicated region
    $region22: #{tpu_custom_call.1} parent=1 // pred_check
      _
    $region23: #{tpu_custom_call.1} parent=1 // pred_check_branch
      %67 = sbr.rel (0) target = $region25
    $region24: #{tpu_custom_call.1} parent=1 // pred_region
      %69 = dma.done [#allocation3], 2048
    $region25: #{tpu_custom_call.1} parent=1 // pred_fallthru
      _
    // Predicated region
    $region26: #{tpu_custom_call.1} parent=1 // pred_check
      _
    $region27: #{tpu_custom_call.1} parent=1 // pred_check_branch
      %71 = sbr.rel (0) target = $region29
    $region28: #{tpu_custom_call.1} parent=1 // pred_region
      %73 = dma.done [#allocation6], 32768
    $region29: #{tpu_custom_call.1} parent=1 // pred_fallthru
      _
    // Predicated region
    $region30: #{tpu_custom_call.1} parent=1 // pred_check
      _
    $region31: #{tpu_custom_call.1} parent=1 // pred_check_branch
      %75 = sbr.rel (0) target = $region33
    $region32: #{tpu_custom_call.1} parent=1 // pred_region
      %77 = dma.done [#allocation6], 32
    $region33: #{tpu_custom_call.1} parent=1 // pred_fallthru
      _
    // Predicated region
    $region34: #{tpu_custom_call.1} parent=1 // pred_check
      _
    $region35: #{tpu_custom_call.1} parent=1 // pred_check_branch
      %79 = sbr.rel (0) target = $region37
    $region36: #{tpu_custom_call.1} parent=1 // pred_region
      %81 = dma.done [#allocation9], 2048
    $region37: #{tpu_custom_call.1} parent=1 // pred_fallthru
      _
    %v82 = vld [vmem:[#allocation2] sm:$0xff]
    %v83 = vld [vmem:[#allocation2 + $0x8] sm:$0xff]
    %v84 = vld [vmem:[#allocation2 + $0x10] sm:$0xff]
    %v85 = vld [vmem:[#allocation2 + $0x18] sm:$0xff]
    %v86 = vld [vmem:[#allocation2 + $0x20] sm:$0xff]
    %v87 = vld [vmem:[#allocation2 + $0x28] sm:$0xff]
    %v88 = vld [vmem:[#allocation2 + $0x30] sm:$0xff]
    %v89 = vld [vmem:[#allocation2 + $0x38] sm:$0xff]
    %v90 = vld [vmem:[#allocation2 + $0x40] sm:$0xff]
    %v91 = vld [vmem:[#allocation2 + $0x48] sm:$0xff]
    %v92 = vld [vmem:[#allocation2 + $0x50] sm:$0xff]
    %v93 = vld [vmem:[#allocation2 + $0x58] sm:$0xff]
    %v94 = vld [vmem:[#allocation2 + $0x60] sm:$0xff]
    %v95 = vld [vmem:[#allocation2 + $0x68] sm:$0xff]
    %v96 = vld [vmem:[#allocation2 + $0x70] sm:$0xff]
    %v97 = vld [vmem:[#allocation2 + $0x78] sm:$0xff]
    %v98 = vld [vmem:[#allocation5] sm:$0xff]
    %v99 = vld [vmem:[#allocation5 + $0x8] sm:$0xff]
    %v100 = vld [vmem:[#allocation5 + $0x10] sm:$0xff]
    %v101 = vld [vmem:[#allocation5 + $0x18] sm:$0xff]
    %v102 = vld [vmem:[#allocation5 + $0x20] sm:$0xff]
    %v103 = vld [vmem:[#allocation5 + $0x28] sm:$0xff]
    %v104 = vld [vmem:[#allocation5 + $0x30] sm:$0xff]
    %v105 = vld [vmem:[#allocation5 + $0x38] sm:$0xff]
    %v106 = vld [vmem:[#allocation5 + $0x40] sm:$0xff]
    %v107 = vld [vmem:[#allocation5 + $0x48] sm:$0xff]
    %v108 = vld [vmem:[#allocation5 + $0x50] sm:$0xff]
    %v109 = vld [vmem:[#allocation5 + $0x58] sm:$0xff]
    %v110 = vld [vmem:[#allocation5 + $0x60] sm:$0xff]
    %v111 = vld [vmem:[#allocation5 + $0x68] sm:$0xff]
    %v112 = vld [vmem:[#allocation5 + $0x70] sm:$0xff]
    %v113 = vld [vmem:[#allocation5 + $0x78] sm:$0xff]
    %v114 = vld [vmem:[#allocation5 + $0x80] sm:$0xff]
    %v115 = vld [vmem:[#allocation5 + $0x88] sm:$0xff]
    %v116 = vld [vmem:[#allocation5 + $0x90] sm:$0xff]
    %v117 = vld [vmem:[#allocation5 + $0x98] sm:$0xff]
    %v118 = vld [vmem:[#allocation5 + $0xa0] sm:$0xff]
    %v119 = vld [vmem:[#allocation5 + $0xa8] sm:$0xff]
    %v120 = vld [vmem:[#allocation5 + $0xb0] sm:$0xff]
    %v121 = vld [vmem:[#allocation5 + $0xb8] sm:$0xff]
    %v122 = vld [vmem:[#allocation5 + $0xc0] sm:$0xff]
    %v123 = vld [vmem:[#allocation5 + $0xc8] sm:$0xff]
    %v124 = vld [vmem:[#allocation5 + $0xd0] sm:$0xff]
    %v125 = vld [vmem:[#allocation5 + $0xd8] sm:$0xff]
    %v126 = vld [vmem:[#allocation5 + $0xe0] sm:$0xff]
    %v127 = vld [vmem:[#allocation5 + $0xe8] sm:$0xff]
    %v128 = vld [vmem:[#allocation5 + $0xf0] sm:$0xff]
    %v129 = vld [vmem:[#allocation5 + $0xf8] sm:$0xff]
    %v130 = vld [vmem:[#allocation5 + $0x100] sm:$0xff]
    %v131 = vld [vmem:[#allocation5 + $0x108] sm:$0xff]
    %v132 = vld [vmem:[#allocation5 + $0x110] sm:$0xff]
    %v133 = vld [vmem:[#allocation5 + $0x118] sm:$0xff]
    %v134 = vld [vmem:[#allocation5 + $0x120] sm:$0xff]
    %v135 = vld [vmem:[#allocation5 + $0x128] sm:$0xff]
    %v136 = vld [vmem:[#allocation5 + $0x130] sm:$0xff]
    %v137 = vld [vmem:[#allocation5 + $0x138] sm:$0xff]
    %v138 = vld [vmem:[#allocation5 + $0x140] sm:$0xff]
    %v139 = vld [vmem:[#allocation5 + $0x148] sm:$0xff]
    %v140 = vld [vmem:[#allocation5 + $0x150] sm:$0xff]
    %v141 = vld [vmem:[#allocation5 + $0x158] sm:$0xff]
    %v142 = vld [vmem:[#allocation5 + $0x160] sm:$0xff]
    %v143 = vld [vmem:[#allocation5 + $0x168] sm:$0xff]
    %v144 = vld [vmem:[#allocation5 + $0x170] sm:$0xff]
    %v145 = vld [vmem:[#allocation5 + $0x178] sm:$0xff]
    %v146 = vld [vmem:[#allocation5 + $0x180] sm:$0xff]
    %v147 = vld [vmem:[#allocation5 + $0x188] sm:$0xff]
    %v148 = vld [vmem:[#allocation5 + $0x190] sm:$0xff]
    %v149 = vld [vmem:[#allocation5 + $0x198] sm:$0xff]
    %v150 = vld [vmem:[#allocation5 + $0x1a0] sm:$0xff]
    %v151 = vld [vmem:[#allocation5 + $0x1a8] sm:$0xff]
    %v152 = vld [vmem:[#allocation5 + $0x1b0] sm:$0xff]
    %v153 = vld [vmem:[#allocation5 + $0x1b8] sm:$0xff]
    %v154 = vld [vmem:[#allocation5 + $0x1c0] sm:$0xff]
    %v155 = vld [vmem:[#allocation5 + $0x1c8] sm:$0xff]
    %v156 = vld [vmem:[#allocation5 + $0x1d0] sm:$0xff]
    %v157 = vld [vmem:[#allocation5 + $0x1d8] sm:$0xff]
    %v158 = vld [vmem:[#allocation5 + $0x1e0] sm:$0xff]
    %v159 = vld [vmem:[#allocation5 + $0x1e8] sm:$0xff]
    %v160 = vld [vmem:[#allocation5 + $0x1f0] sm:$0xff]
    %v161 = vld [vmem:[#allocation5 + $0x1f8] sm:$0xff]
    %v162 = vld [vmem:[#allocation5 + $0x200] sm:$0xff]
    %v163 = vld [vmem:[#allocation5 + $0x208] sm:$0xff]
    %v164 = vld [vmem:[#allocation5 + $0x210] sm:$0xff]
    %v165 = vld [vmem:[#allocation5 + $0x218] sm:$0xff]
    %v166 = vld [vmem:[#allocation5 + $0x220] sm:$0xff]
    %v167 = vld [vmem:[#allocation5 + $0x228] sm:$0xff]
    %v168 = vld [vmem:[#allocation5 + $0x230] sm:$0xff]
    %v169 = vld [vmem:[#allocation5 + $0x238] sm:$0xff]
    %v170 = vld [vmem:[#allocation5 + $0x240] sm:$0xff]
    %v171 = vld [vmem:[#allocation5 + $0x248] sm:$0xff]
    %v172 = vld [vmem:[#allocation5 + $0x250] sm:$0xff]
    %v173 = vld [vmem:[#allocation5 + $0x258] sm:$0xff]
    %v174 = vld [vmem:[#allocation5 + $0x260] sm:$0xff]
    %v175 = vld [vmem:[#allocation5 + $0x268] sm:$0xff]
    %v176 = vld [vmem:[#allocation5 + $0x270] sm:$0xff]
    %v177 = vld [vmem:[#allocation5 + $0x278] sm:$0xff]
    %v178 = vld [vmem:[#allocation5 + $0x280] sm:$0xff]
    %v179 = vld [vmem:[#allocation5 + $0x288] sm:$0xff]
    %v180 = vld [vmem:[#allocation5 + $0x290] sm:$0xff]
    %v181 = vld [vmem:[#allocation5 + $0x298] sm:$0xff]
    %v182 = vld [vmem:[#allocation5 + $0x2a0] sm:$0xff]
    %v183 = vld [vmem:[#allocation5 + $0x2a8] sm:$0xff]
    %v184 = vld [vmem:[#allocation5 + $0x2b0] sm:$0xff]
    %v185 = vld [vmem:[#allocation5 + $0x2b8] sm:$0xff]
    %v186 = vld [vmem:[#allocation5 + $0x2c0] sm:$0xff]
    %v187 = vld [vmem:[#allocation5 + $0x2c8] sm:$0xff]
    %v188 = vld [vmem:[#allocation5 + $0x2d0] sm:$0xff]
    %v189 = vld [vmem:[#allocation5 + $0x2d8] sm:$0xff]
    %v190 = vld [vmem:[#allocation5 + $0x2e0] sm:$0xff]
    %v191 = vld [vmem:[#allocation5 + $0x2e8] sm:$0xff]
    %v192 = vld [vmem:[#allocation5 + $0x2f0] sm:$0xff]
    %v193 = vld [vmem:[#allocation5 + $0x2f8] sm:$0xff]
    %v194 = vld [vmem:[#allocation5 + $0x300] sm:$0xff]
    %v195 = vld [vmem:[#allocation5 + $0x308] sm:$0xff]
    %v196 = vld [vmem:[#allocation5 + $0x310] sm:$0xff]
    %v197 = vld [vmem:[#allocation5 + $0x318] sm:$0xff]
    %v198 = vld [vmem:[#allocation5 + $0x320] sm:$0xff]
    %v199 = vld [vmem:[#allocation5 + $0x328] sm:$0xff]
    %v200 = vld [vmem:[#allocation5 + $0x330] sm:$0xff]
    %v201 = vld [vmem:[#allocation5 + $0x338] sm:$0xff]
    %v202 = vld [vmem:[#allocation5 + $0x340] sm:$0xff]
    %v203 = vld [vmem:[#allocation5 + $0x348] sm:$0xff]
    %v204 = vld [vmem:[#allocation5 + $0x350] sm:$0xff]
    %v205 = vld [vmem:[#allocation5 + $0x358] sm:$0xff]
    %v206 = vld [vmem:[#allocation5 + $0x360] sm:$0xff]
    %v207 = vld [vmem:[#allocation5 + $0x368] sm:$0xff]
    %v208 = vld [vmem:[#allocation5 + $0x370] sm:$0xff]
    %v209 = vld [vmem:[#allocation5 + $0x378] sm:$0xff]
    %v210 = vld [vmem:[#allocation5 + $0x380] sm:$0xff]
    %v211 = vld [vmem:[#allocation5 + $0x388] sm:$0xff]
    %v212 = vld [vmem:[#allocation5 + $0x390] sm:$0xff]
    %v213 = vld [vmem:[#allocation5 + $0x398] sm:$0xff]
    %v214 = vld [vmem:[#allocation5 + $0x3a0] sm:$0xff]
    %v215 = vld [vmem:[#allocation5 + $0x3a8] sm:$0xff]
    %v216 = vld [vmem:[#allocation5 + $0x3b0] sm:$0xff]
    %v217 = vld [vmem:[#allocation5 + $0x3b8] sm:$0xff]
    %v218 = vld [vmem:[#allocation5 + $0x3c0] sm:$0xff]
    %v219 = vld [vmem:[#allocation5 + $0x3c8] sm:$0xff]
    %v220 = vld [vmem:[#allocation5 + $0x3d0] sm:$0xff]
    %v221 = vld [vmem:[#allocation5 + $0x3d8] sm:$0xff]
    %v222 = vld [vmem:[#allocation5 + $0x3e0] sm:$0xff]
    %v223 = vld [vmem:[#allocation5 + $0x3e8] sm:$0xff]
    %v224 = vld [vmem:[#allocation5 + $0x3f0] sm:$0xff]
    %v225 = vld [vmem:[#allocation5 + $0x3f8] sm:$0xff]
    %v226 = vld [vmem:[#allocation5 + $0x400] sm:$0xff]
    %v227 = vld [vmem:[#allocation5 + $0x408] sm:$0xff]
    %v228 = vld [vmem:[#allocation5 + $0x410] sm:$0xff]
    %v229 = vld [vmem:[#allocation5 + $0x418] sm:$0xff]
    %v230 = vld [vmem:[#allocation5 + $0x420] sm:$0xff]
    %v231 = vld [vmem:[#allocation5 + $0x428] sm:$0xff]
    %v232 = vld [vmem:[#allocation5 + $0x430] sm:$0xff]
    %v233 = vld [vmem:[#allocation5 + $0x438] sm:$0xff]
    %v234 = vld [vmem:[#allocation5 + $0x440] sm:$0xff]
    %v235 = vld [vmem:[#allocation5 + $0x448] sm:$0xff]
    %v236 = vld [vmem:[#allocation5 + $0x450] sm:$0xff]
    %v237 = vld [vmem:[#allocation5 + $0x458] sm:$0xff]
    %v238 = vld [vmem:[#allocation5 + $0x460] sm:$0xff]
    %v239 = vld [vmem:[#allocation5 + $0x468] sm:$0xff]
    %v240 = vld [vmem:[#allocation5 + $0x470] sm:$0xff]
    %v241 = vld [vmem:[#allocation5 + $0x478] sm:$0xff]
    %v242 = vld [vmem:[#allocation5 + $0x480] sm:$0xff]
    %v243 = vld [vmem:[#allocation5 + $0x488] sm:$0xff]
    %v244 = vld [vmem:[#allocation5 + $0x490] sm:$0xff]
    %v245 = vld [vmem:[#allocation5 + $0x498] sm:$0xff]
    %v246 = vld [vmem:[#allocation5 + $0x4a0] sm:$0xff]
    %v247 = vld [vmem:[#allocation5 + $0x4a8] sm:$0xff]
    %v248 = vld [vmem:[#allocation5 + $0x4b0] sm:$0xff]
    %v249 = vld [vmem:[#allocation5 + $0x4b8] sm:$0xff]
    %v250 = vld [vmem:[#allocation5 + $0x4c0] sm:$0xff]
    %v251 = vld [vmem:[#allocation5 + $0x4c8] sm:$0xff]
    %v252 = vld [vmem:[#allocation5 + $0x4d0] sm:$0xff]
    %v253 = vld [vmem:[#allocation5 + $0x4d8] sm:$0xff]
    %v254 = vld [vmem:[#allocation5 + $0x4e0] sm:$0xff]
    %v255 = vld [vmem:[#allocation5 + $0x4e8] sm:$0xff]
    %v256 = vld [vmem:[#allocation5 + $0x4f0] sm:$0xff]
    %v257 = vld [vmem:[#allocation5 + $0x4f8] sm:$0xff]
    %v258 = vld [vmem:[#allocation5 + $0x500] sm:$0xff]
    %v259 = vld [vmem:[#allocation5 + $0x508] sm:$0xff]
    %v260 = vld [vmem:[#allocation5 + $0x510] sm:$0xff]
    %v261 = vld [vmem:[#allocation5 + $0x518] sm:$0xff]
    %v262 = vld [vmem:[#allocation5 + $0x520] sm:$0xff]
    %v263 = vld [vmem:[#allocation5 + $0x528] sm:$0xff]
    %v264 = vld [vmem:[#allocation5 + $0x530] sm:$0xff]
    %v265 = vld [vmem:[#allocation5 + $0x538] sm:$0xff]
    %v266 = vld [vmem:[#allocation5 + $0x540] sm:$0xff]
    %v267 = vld [vmem:[#allocation5 + $0x548] sm:$0xff]
    %v268 = vld [vmem:[#allocation5 + $0x550] sm:$0xff]
    %v269 = vld [vmem:[#allocation5 + $0x558] sm:$0xff]
    %v270 = vld [vmem:[#allocation5 + $0x560] sm:$0xff]
    %v271 = vld [vmem:[#allocation5 + $0x568] sm:$0xff]
    %v272 = vld [vmem:[#allocation5 + $0x570] sm:$0xff]
    %v273 = vld [vmem:[#allocation5 + $0x578] sm:$0xff]
    %v274 = vld [vmem:[#allocation5 + $0x580] sm:$0xff]
    %v275 = vld [vmem:[#allocation5 + $0x588] sm:$0xff]
    %v276 = vld [vmem:[#allocation5 + $0x590] sm:$0xff]
    %v277 = vld [vmem:[#allocation5 + $0x598] sm:$0xff]
    %v278 = vld [vmem:[#allocation5 + $0x5a0] sm:$0xff]
    %v279 = vld [vmem:[#allocation5 + $0x5a8] sm:$0xff]
    %v280 = vld [vmem:[#allocation5 + $0x5b0] sm:$0xff]
    %v281 = vld [vmem:[#allocation5 + $0x5b8] sm:$0xff]
    %v282 = vld [vmem:[#allocation5 + $0x5c0] sm:$0xff]
    %v283 = vld [vmem:[#allocation5 + $0x5c8] sm:$0xff]
    %v284 = vld [vmem:[#allocation5 + $0x5d0] sm:$0xff]
    %v285 = vld [vmem:[#allocation5 + $0x5d8] sm:$0xff]
    %v286 = vld [vmem:[#allocation5 + $0x5e0] sm:$0xff]
    %v287 = vld [vmem:[#allocation5 + $0x5e8] sm:$0xff]
    %v288 = vld [vmem:[#allocation5 + $0x5f0] sm:$0xff]
    %v289 = vld [vmem:[#allocation5 + $0x5f8] sm:$0xff]
    %v290 = vld [vmem:[#allocation5 + $0x600] sm:$0xff]
    %v291 = vld [vmem:[#allocation5 + $0x608] sm:$0xff]
    %v292 = vld [vmem:[#allocation5 + $0x610] sm:$0xff]
    %v293 = vld [vmem:[#allocation5 + $0x618] sm:$0xff]
    %v294 = vld [vmem:[#allocation5 + $0x620] sm:$0xff]
    %v295 = vld [vmem:[#allocation5 + $0x628] sm:$0xff]
    %v296 = vld [vmem:[#allocation5 + $0x630] sm:$0xff]
    %v297 = vld [vmem:[#allocation5 + $0x638] sm:$0xff]
    %v298 = vld [vmem:[#allocation5 + $0x640] sm:$0xff]
    %v299 = vld [vmem:[#allocation5 + $0x648] sm:$0xff]
    %v300 = vld [vmem:[#allocation5 + $0x650] sm:$0xff]
    %v301 = vld [vmem:[#allocation5 + $0x658] sm:$0xff]
    %v302 = vld [vmem:[#allocation5 + $0x660] sm:$0xff]
    %v303 = vld [vmem:[#allocation5 + $0x668] sm:$0xff]
    %v304 = vld [vmem:[#allocation5 + $0x670] sm:$0xff]
    %v305 = vld [vmem:[#allocation5 + $0x678] sm:$0xff]
    %v306 = vld [vmem:[#allocation5 + $0x680] sm:$0xff]
    %v307 = vld [vmem:[#allocation5 + $0x688] sm:$0xff]
    %v308 = vld [vmem:[#allocation5 + $0x690] sm:$0xff]
    %v309 = vld [vmem:[#allocation5 + $0x698] sm:$0xff]
    %v310 = vld [vmem:[#allocation5 + $0x6a0] sm:$0xff]
    %v311 = vld [vmem:[#allocation5 + $0x6a8] sm:$0xff]
    %v312 = vld [vmem:[#allocation5 + $0x6b0] sm:$0xff]
    %v313 = vld [vmem:[#allocation5 + $0x6b8] sm:$0xff]
    %v314 = vld [vmem:[#allocation5 + $0x6c0] sm:$0xff]
    %v315 = vld [vmem:[#allocation5 + $0x6c8] sm:$0xff]
    %v316 = vld [vmem:[#allocation5 + $0x6d0] sm:$0xff]
    %v317 = vld [vmem:[#allocation5 + $0x6d8] sm:$0xff]
    %v318 = vld [vmem:[#allocation5 + $0x6e0] sm:$0xff]
    %v319 = vld [vmem:[#allocation5 + $0x6e8] sm:$0xff]
    %v320 = vld [vmem:[#allocation5 + $0x6f0] sm:$0xff]
    %v321 = vld [vmem:[#allocation5 + $0x6f8] sm:$0xff]
    %v322 = vld [vmem:[#allocation5 + $0x700] sm:$0xff]
    %v323 = vld [vmem:[#allocation5 + $0x708] sm:$0xff]
    %v324 = vld [vmem:[#allocation5 + $0x710] sm:$0xff]
    %v325 = vld [vmem:[#allocation5 + $0x718] sm:$0xff]
    %v326 = vld [vmem:[#allocation5 + $0x720] sm:$0xff]
    %v327 = vld [vmem:[#allocation5 + $0x728] sm:$0xff]
    %v328 = vld [vmem:[#allocation5 + $0x730] sm:$0xff]
    %v329 = vld [vmem:[#allocation5 + $0x738] sm:$0xff]
    %v330 = vld [vmem:[#allocation5 + $0x740] sm:$0xff]
    %v331 = vld [vmem:[#allocation5 + $0x748] sm:$0xff]
    %v332 = vld [vmem:[#allocation5 + $0x750] sm:$0xff]
    %v333 = vld [vmem:[#allocation5 + $0x758] sm:$0xff]
    %v334 = vld [vmem:[#allocation5 + $0x760] sm:$0xff]
    %v335 = vld [vmem:[#allocation5 + $0x768] sm:$0xff]
    %v336 = vld [vmem:[#allocation5 + $0x770] sm:$0xff]
    %v337 = vld [vmem:[#allocation5 + $0x778] sm:$0xff]
    %v338 = vld [vmem:[#allocation5 + $0x780] sm:$0xff]
    %v339 = vld [vmem:[#allocation5 + $0x788] sm:$0xff]
    %v340 = vld [vmem:[#allocation5 + $0x790] sm:$0xff]
    %v341 = vld [vmem:[#allocation5 + $0x798] sm:$0xff]
    %v342 = vld [vmem:[#allocation5 + $0x7a0] sm:$0xff]
    %v343 = vld [vmem:[#allocation5 + $0x7a8] sm:$0xff]
    %v344 = vld [vmem:[#allocation5 + $0x7b0] sm:$0xff]
    %v345 = vld [vmem:[#allocation5 + $0x7b8] sm:$0xff]
    %v346 = vld [vmem:[#allocation5 + $0x7c0] sm:$0xff]
    %v347 = vld [vmem:[#allocation5 + $0x7c8] sm:$0xff]
    %v348 = vld [vmem:[#allocation5 + $0x7d0] sm:$0xff]
    %v349 = vld [vmem:[#allocation5 + $0x7d8] sm:$0xff]
    %v350 = vld [vmem:[#allocation5 + $0x7e0] sm:$0xff]
    %v351 = vld [vmem:[#allocation5 + $0x7e8] sm:$0xff]
    %v352 = vld [vmem:[#allocation5 + $0x7f0] sm:$0xff]
    %v353 = vld [vmem:[#allocation5 + $0x7f8] sm:$0xff]
    %v370 = vunpack.c.l.b16 %v82
    %v371 = vunpack.c.h.b16 %v82
    %v372 = vunpack.c.l.b16 %v83
    %v373 = vunpack.c.h.b16 %v83
    %v374 = vunpack.c.l.b16 %v84
    %v375 = vunpack.c.h.b16 %v84
    %v376 = vunpack.c.l.b16 %v85
    %v377 = vunpack.c.h.b16 %v85
    %v378 = vunpack.c.l.b16 %v86
    %v379 = vunpack.c.h.b16 %v86
    %v380 = vunpack.c.l.b16 %v87
    %v381 = vunpack.c.h.b16 %v87
    %v382 = vunpack.c.l.b16 %v88
    %v383 = vunpack.c.h.b16 %v88
    %v384 = vunpack.c.l.b16 %v89
    %v385 = vunpack.c.h.b16 %v89
    %v386 = vunpack.c.l.b16 %v90
    %v387 = vunpack.c.h.b16 %v90
    %v388 = vunpack.c.l.b16 %v91
    %v389 = vunpack.c.h.b16 %v91
    %v390 = vunpack.c.l.b16 %v92
    %v391 = vunpack.c.h.b16 %v92
    %v392 = vunpack.c.l.b16 %v93
    %v393 = vunpack.c.h.b16 %v93
    %v394 = vunpack.c.l.b16 %v94
    %v395 = vunpack.c.h.b16 %v94
    %v396 = vunpack.c.l.b16 %v95
    %v397 = vunpack.c.h.b16 %v95
    %v398 = vunpack.c.l.b16 %v96
    %v399 = vunpack.c.h.b16 %v96
    %v400 = vunpack.c.l.b16 %v97
    %v401 = vunpack.c.h.b16 %v97
    %v402 = vpack.c.b16 %v386, %v370
    %v403 = vpack.c.b16 %v387, %v371
    %v404 = vpack.c.b16 %v388, %v372
    %v405 = vpack.c.b16 %v389, %v373
    %v406 = vpack.c.b16 %v390, %v374
    %v407 = vpack.c.b16 %v391, %v375
    %v408 = vpack.c.b16 %v392, %v376
    %v409 = vpack.c.b16 %v393, %v377
    %v410 = vpack.c.b16 %v394, %v378
    %v411 = vpack.c.b16 %v395, %v379
    %v412 = vpack.c.b16 %v396, %v380
    %v413 = vpack.c.b16 %v397, %v381
    %v414 = vpack.c.b16 %v398, %v382
    %v415 = vpack.c.b16 %v399, %v383
    %v416 = vpack.c.b16 %v400, %v384
    %v417 = vpack.c.b16 %v401, %v385
    %v690 = vunpack.c.l.b16 %v98
    %v691 = vunpack.c.h.b16 %v98
    %v692 = vunpack.c.l.b16 %v99
    %v693 = vunpack.c.h.b16 %v99
    %v694 = vunpack.c.l.b16 %v100
    %v695 = vunpack.c.h.b16 %v100
    %v696 = vunpack.c.l.b16 %v101
    %v697 = vunpack.c.h.b16 %v101
    %v698 = vunpack.c.l.b16 %v102
    %v699 = vunpack.c.h.b16 %v102
    %v700 = vunpack.c.l.b16 %v103
    %v701 = vunpack.c.h.b16 %v103
    %v702 = vunpack.c.l.b16 %v104
    %v703 = vunpack.c.h.b16 %v104
    %v704 = vunpack.c.l.b16 %v105
    %v705 = vunpack.c.h.b16 %v105
    %v706 = vunpack.c.l.b16 %v106
    %v707 = vunpack.c.h.b16 %v106
    %v708 = vunpack.c.l.b16 %v107
    %v709 = vunpack.c.h.b16 %v107
    %v710 = vunpack.c.l.b16 %v108
    %v711 = vunpack.c.h.b16 %v108
    %v712 = vunpack.c.l.b16 %v109
    %v713 = vunpack.c.h.b16 %v109
    %v714 = vunpack.c.l.b16 %v110
    %v715 = vunpack.c.h.b16 %v110
    %v716 = vunpack.c.l.b16 %v111
    %v717 = vunpack.c.h.b16 %v111
    %v718 = vunpack.c.l.b16 %v112
    %v719 = vunpack.c.h.b16 %v112
    %v720 = vunpack.c.l.b16 %v113
    %v721 = vunpack.c.h.b16 %v113
    %v722 = vunpack.c.l.b16 %v114
    %v723 = vunpack.c.h.b16 %v114
    %v724 = vunpack.c.l.b16 %v115
    %v725 = vunpack.c.h.b16 %v115
    %v726 = vunpack.c.l.b16 %v116
    %v727 = vunpack.c.h.b16 %v116
    %v728 = vunpack.c.l.b16 %v117
    %v729 = vunpack.c.h.b16 %v117
    %v730 = vunpack.c.l.b16 %v118
    %v731 = vunpack.c.h.b16 %v118
    %v732 = vunpack.c.l.b16 %v119
    %v733 = vunpack.c.h.b16 %v119
    %v734 = vunpack.c.l.b16 %v120
    %v735 = vunpack.c.h.b16 %v120
    %v736 = vunpack.c.l.b16 %v121
    %v737 = vunpack.c.h.b16 %v121
    %v738 = vunpack.c.l.b16 %v122
    %v739 = vunpack.c.h.b16 %v122
    %v740 = vunpack.c.l.b16 %v123
    %v741 = vunpack.c.h.b16 %v123
    %v742 = vunpack.c.l.b16 %v124
    %v743 = vunpack.c.h.b16 %v124
    %v744 = vunpack.c.l.b16 %v125
    %v745 = vunpack.c.h.b16 %v125
    %v746 = vunpack.c.l.b16 %v126
    %v747 = vunpack.c.h.b16 %v126
    %v748 = vunpack.c.l.b16 %v127
    %v749 = vunpack.c.h.b16 %v127
    %v750 = vunpack.c.l.b16 %v128
    %v751 = vunpack.c.h.b16 %v128
    %v752 = vunpack.c.l.b16 %v129
    %v753 = vunpack.c.h.b16 %v129
    %v754 = vunpack.c.l.b16 %v130
    %v755 = vunpack.c.h.b16 %v130
    %v756 = vunpack.c.l.b16 %v131
    %v757 = vunpack.c.h.b16 %v131
    %v758 = vunpack.c.l.b16 %v132
    %v759 = vunpack.c.h.b16 %v132
    %v760 = vunpack.c.l.b16 %v133
    %v761 = vunpack.c.h.b16 %v133
    %v762 = vunpack.c.l.b16 %v134
    %v763 = vunpack.c.h.b16 %v134
    %v764 = vunpack.c.l.b16 %v135
    %v765 = vunpack.c.h.b16 %v135
    %v766 = vunpack.c.l.b16 %v136
    %v767 = vunpack.c.h.b16 %v136
    %v768 = vunpack.c.l.b16 %v137
    %v769 = vunpack.c.h.b16 %v137
    %v770 = vunpack.c.l.b16 %v138
    %v771 = vunpack.c.h.b16 %v138
    %v772 = vunpack.c.l.b16 %v139
    %v773 = vunpack.c.h.b16 %v139
    %v774 = vunpack.c.l.b16 %v140
    %v775 = vunpack.c.h.b16 %v140
    %v776 = vunpack.c.l.b16 %v141
    %v777 = vunpack.c.h.b16 %v141
    %v778 = vunpack.c.l.b16 %v142
    %v779 = vunpack.c.h.b16 %v142
    %v780 = vunpack.c.l.b16 %v143
    %v781 = vunpack.c.h.b16 %v143
    %v782 = vunpack.c.l.b16 %v144
    %v783 = vunpack.c.h.b16 %v144
    %v784 = vunpack.c.l.b16 %v145
    %v785 = vunpack.c.h.b16 %v145
    %v786 = vunpack.c.l.b16 %v146
    %v787 = vunpack.c.h.b16 %v146
    %v788 = vunpack.c.l.b16 %v147
    %v789 = vunpack.c.h.b16 %v147
    %v790 = vunpack.c.l.b16 %v148
    %v791 = vunpack.c.h.b16 %v148
    %v792 = vunpack.c.l.b16 %v149
    %v793 = vunpack.c.h.b16 %v149
    %v794 = vunpack.c.l.b16 %v150
    %v795 = vunpack.c.h.b16 %v150
    %v796 = vunpack.c.l.b16 %v151
    %v797 = vunpack.c.h.b16 %v151
    %v798 = vunpack.c.l.b16 %v152
    %v799 = vunpack.c.h.b16 %v152
    %v800 = vunpack.c.l.b16 %v153
    %v801 = vunpack.c.h.b16 %v153
    %v802 = vunpack.c.l.b16 %v154
    %v803 = vunpack.c.h.b16 %v154
    %v804 = vunpack.c.l.b16 %v155
    %v805 = vunpack.c.h.b16 %v155
    %v806 = vunpack.c.l.b16 %v156
    %v807 = vunpack.c.h.b16 %v156
    %v808 = vunpack.c.l.b16 %v157
    %v809 = vunpack.c.h.b16 %v157
    %v810 = vunpack.c.l.b16 %v158
    %v811 = vunpack.c.h.b16 %v158
    %v812 = vunpack.c.l.b16 %v159
    %v813 = vunpack.c.h.b16 %v159
    %v814 = vunpack.c.l.b16 %v160
    %v815 = vunpack.c.h.b16 %v160
    %v816 = vunpack.c.l.b16 %v161
    %v817 = vunpack.c.h.b16 %v161
    %v818 = vunpack.c.l.b16 %v162
    %v819 = vunpack.c.h.b16 %v162
    %v820 = vunpack.c.l.b16 %v163
    %v821 = vunpack.c.h.b16 %v163
    %v822 = vunpack.c.l.b16 %v164
    %v823 = vunpack.c.h.b16 %v164
    %v824 = vunpack.c.l.b16 %v165
    %v825 = vunpack.c.h.b16 %v165
    %v826 = vunpack.c.l.b16 %v166
    %v827 = vunpack.c.h.b16 %v166
    %v828 = vunpack.c.l.b16 %v167
    %v829 = vunpack.c.h.b16 %v167
    %v830 = vunpack.c.l.b16 %v168
    %v831 = vunpack.c.h.b16 %v168
    %v832 = vunpack.c.l.b16 %v169
    %v833 = vunpack.c.h.b16 %v169
    %v834 = vunpack.c.l.b16 %v170
    %v835 = vunpack.c.h.b16 %v170
    %v836 = vunpack.c.l.b16 %v171
    %v837 = vunpack.c.h.b16 %v171
    %v838 = vunpack.c.l.b16 %v172
    %v839 = vunpack.c.h.b16 %v172
    %v840 = vunpack.c.l.b16 %v173
    %v841 = vunpack.c.h.b16 %v173
    %v842 = vunpack.c.l.b16 %v174
    %v843 = vunpack.c.h.b16 %v174
    %v844 = vunpack.c.l.b16 %v175
    %v845 = vunpack.c.h.b16 %v175
    %v846 = vunpack.c.l.b16 %v176
    %v847 = vunpack.c.h.b16 %v176
    %v848 = vunpack.c.l.b16 %v177
    %v849 = vunpack.c.h.b16 %v177
    %v850 = vunpack.c.l.b16 %v178
    %v851 = vunpack.c.h.b16 %v178
    %v852 = vunpack.c.l.b16 %v179
    %v853 = vunpack.c.h.b16 %v179
    %v854 = vunpack.c.l.b16 %v180
    %v855 = vunpack.c.h.b16 %v180
    %v856 = vunpack.c.l.b16 %v181
    %v857 = vunpack.c.h.b16 %v181
    %v858 = vunpack.c.l.b16 %v182
    %v859 = vunpack.c.h.b16 %v182
    %v860 = vunpack.c.l.b16 %v183
    %v861 = vunpack.c.h.b16 %v183
    %v862 = vunpack.c.l.b16 %v184
    %v863 = vunpack.c.h.b16 %v184
    %v864 = vunpack.c.l.b16 %v185
    %v865 = vunpack.c.h.b16 %v185
    %v866 = vunpack.c.l.b16 %v186
    %v867 = vunpack.c.h.b16 %v186
    %v868 = vunpack.c.l.b16 %v187
    %v869 = vunpack.c.h.b16 %v187
    %v870 = vunpack.c.l.b16 %v188
    %v871 = vunpack.c.h.b16 %v188
    %v872 = vunpack.c.l.b16 %v189
    %v873 = vunpack.c.h.b16 %v189
    %v874 = vunpack.c.l.b16 %v190
    %v875 = vunpack.c.h.b16 %v190
    %v876 = vunpack.c.l.b16 %v191
    %v877 = vunpack.c.h.b16 %v191
    %v878 = vunpack.c.l.b16 %v192
    %v879 = vunpack.c.h.b16 %v192
    %v880 = vunpack.c.l.b16 %v193
    %v881 = vunpack.c.h.b16 %v193
    %v882 = vunpack.c.l.b16 %v194
    %v883 = vunpack.c.h.b16 %v194
    %v884 = vunpack.c.l.b16 %v195
    %v885 = vunpack.c.h.b16 %v195
    %v886 = vunpack.c.l.b16 %v196
    %v887 = vunpack.c.h.b16 %v196
    %v888 = vunpack.c.l.b16 %v197
    %v889 = vunpack.c.h.b16 %v197
    %v890 = vunpack.c.l.b16 %v198
    %v891 = vunpack.c.h.b16 %v198
    %v892 = vunpack.c.l.b16 %v199
    %v893 = vunpack.c.h.b16 %v199
    %v894 = vunpack.c.l.b16 %v200
    %v895 = vunpack.c.h.b16 %v200
    %v896 = vunpack.c.l.b16 %v201
    %v897 = vunpack.c.h.b16 %v201
    %v898 = vunpack.c.l.b16 %v202
    %v899 = vunpack.c.h.b16 %v202
    %v900 = vunpack.c.l.b16 %v203
    %v901 = vunpack.c.h.b16 %v203
    %v902 = vunpack.c.l.b16 %v204
    %v903 = vunpack.c.h.b16 %v204
    %v904 = vunpack.c.l.b16 %v205
    %v905 = vunpack.c.h.b16 %v205
    %v906 = vunpack.c.l.b16 %v206
    %v907 = vunpack.c.h.b16 %v206
    %v908 = vunpack.c.l.b16 %v207
    %v909 = vunpack.c.h.b16 %v207
    %v910 = vunpack.c.l.b16 %v208
    %v911 = vunpack.c.h.b16 %v208
    %v912 = vunpack.c.l.b16 %v209
    %v913 = vunpack.c.h.b16 %v209
    %v914 = vunpack.c.l.b16 %v210
    %v915 = vunpack.c.h.b16 %v210
    %v916 = vunpack.c.l.b16 %v211
    %v917 = vunpack.c.h.b16 %v211
    %v918 = vunpack.c.l.b16 %v212
    %v919 = vunpack.c.h.b16 %v212
    %v920 = vunpack.c.l.b16 %v213
    %v921 = vunpack.c.h.b16 %v213
    %v922 = vunpack.c.l.b16 %v214
    %v923 = vunpack.c.h.b16 %v214
    %v924 = vunpack.c.l.b16 %v215
    %v925 = vunpack.c.h.b16 %v215
    %v926 = vunpack.c.l.b16 %v216
    %v927 = vunpack.c.h.b16 %v216
    %v928 = vunpack.c.l.b16 %v217
    %v929 = vunpack.c.h.b16 %v217
    %v930 = vunpack.c.l.b16 %v218
    %v931 = vunpack.c.h.b16 %v218
    %v932 = vunpack.c.l.b16 %v219
    %v933 = vunpack.c.h.b16 %v219
    %v934 = vunpack.c.l.b16 %v220
    %v935 = vunpack.c.h.b16 %v220
    %v936 = vunpack.c.l.b16 %v221
    %v937 = vunpack.c.h.b16 %v221
    %v938 = vunpack.c.l.b16 %v222
    %v939 = vunpack.c.h.b16 %v222
    %v940 = vunpack.c.l.b16 %v223
    %v941 = vunpack.c.h.b16 %v223
    %v942 = vunpack.c.l.b16 %v224
    %v943 = vunpack.c.h.b16 %v224
    %v944 = vunpack.c.l.b16 %v225
    %v945 = vunpack.c.h.b16 %v225
    %v946 = vunpack.c.l.b16 %v226
    %v947 = vunpack.c.h.b16 %v226
    %v948 = vunpack.c.l.b16 %v227
    %v949 = vunpack.c.h.b16 %v227
    %v950 = vunpack.c.l.b16 %v228
    %v951 = vunpack.c.h.b16 %v228
    %v952 = vunpack.c.l.b16 %v229
    %v953 = vunpack.c.h.b16 %v229
    %v954 = vunpack.c.l.b16 %v230
    %v955 = vunpack.c.h.b16 %v230
    %v956 = vunpack.c.l.b16 %v231
    %v957 = vunpack.c.h.b16 %v231
    %v958 = vunpack.c.l.b16 %v232
    %v959 = vunpack.c.h.b16 %v232
    %v960 = vunpack.c.l.b16 %v233
    %v961 = vunpack.c.h.b16 %v233
    %v962 = vunpack.c.l.b16 %v234
    %v963 = vunpack.c.h.b16 %v234
    %v964 = vunpack.c.l.b16 %v235
    %v965 = vunpack.c.h.b16 %v235
    %v966 = vunpack.c.l.b16 %v236
    %v967 = vunpack.c.h.b16 %v236
    %v968 = vunpack.c.l.b16 %v237
    %v969 = vunpack.c.h.b16 %v237
    %v970 = vunpack.c.l.b16 %v238
    %v971 = vunpack.c.h.b16 %v238
    %v972 = vunpack.c.l.b16 %v239
    %v973 = vunpack.c.h.b16 %v239
    %v974 = vunpack.c.l.b16 %v240
    %v975 = vunpack.c.h.b16 %v240
    %v976 = vunpack.c.l.b16 %v241
    %v977 = vunpack.c.h.b16 %v241
    %v978 = vunpack.c.l.b16 %v242
    %v979 = vunpack.c.h.b16 %v242
    %v980 = vunpack.c.l.b16 %v243
    %v981 = vunpack.c.h.b16 %v243
    %v982 = vunpack.c.l.b16 %v244
    %v983 = vunpack.c.h.b16 %v244
    %v984 = vunpack.c.l.b16 %v245
    %v985 = vunpack.c.h.b16 %v245
    %v986 = vunpack.c.l.b16 %v246
    %v987 = vunpack.c.h.b16 %v246
    %v988 = vunpack.c.l.b16 %v247
    %v989 = vunpack.c.h.b16 %v247
    %v990 = vunpack.c.l.b16 %v248
    %v991 = vunpack.c.h.b16 %v248
    %v992 = vunpack.c.l.b16 %v249
    %v993 = vunpack.c.h.b16 %v249
    %v994 = vunpack.c.l.b16 %v250
    %v995 = vunpack.c.h.b16 %v250
    %v996 = vunpack.c.l.b16 %v251
    %v997 = vunpack.c.h.b16 %v251
    %v998 = vunpack.c.l.b16 %v252
    %v999 = vunpack.c.h.b16 %v252
    %v1000 = vunpack.c.l.b16 %v253
    %v1001 = vunpack.c.h.b16 %v253
    %v1002 = vunpack.c.l.b16 %v254
    %v1003 = vunpack.c.h.b16 %v254
    %v1004 = vunpack.c.l.b16 %v255
    %v1005 = vunpack.c.h.b16 %v255
    %v1006 = vunpack.c.l.b16 %v256
    %v1007 = vunpack.c.h.b16 %v256
    %v1008 = vunpack.c.l.b16 %v257
    %v1009 = vunpack.c.h.b16 %v257
    %v1010 = vunpack.c.l.b16 %v258
    %v1011 = vunpack.c.h.b16 %v258
    %v1012 = vunpack.c.l.b16 %v259
    %v1013 = vunpack.c.h.b16 %v259
    %v1014 = vunpack.c.l.b16 %v260
    %v1015 = vunpack.c.h.b16 %v260
    %v1016 = vunpack.c.l.b16 %v261
    %v1017 = vunpack.c.h.b16 %v261
    %v1018 = vunpack.c.l.b16 %v262
    %v1019 = vunpack.c.h.b16 %v262
    %v1020 = vunpack.c.l.b16 %v263
    %v1021 = vunpack.c.h.b16 %v263
    %v1022 = vunpack.c.l.b16 %v264
    %v1023 = vunpack.c.h.b16 %v264
    %v1024 = vunpack.c.l.b16 %v265
    %v1025 = vunpack.c.h.b16 %v265
    %v1026 = vunpack.c.l.b16 %v266
    %v1027 = vunpack.c.h.b16 %v266
    %v1028 = vunpack.c.l.b16 %v267
    %v1029 = vunpack.c.h.b16 %v267
    %v1030 = vunpack.c.l.b16 %v268
    %v1031 = vunpack.c.h.b16 %v268
    %v1032 = vunpack.c.l.b16 %v269
    %v1033 = vunpack.c.h.b16 %v269
    %v1034 = vunpack.c.l.b16 %v270
    %v1035 = vunpack.c.h.b16 %v270
    %v1036 = vunpack.c.l.b16 %v271
    %v1037 = vunpack.c.h.b16 %v271
    %v1038 = vunpack.c.l.b16 %v272
    %v1039 = vunpack.c.h.b16 %v272
    %v1040 = vunpack.c.l.b16 %v273
    %v1041 = vunpack.c.h.b16 %v273
    %v1042 = vunpack.c.l.b16 %v274
    %v1043 = vunpack.c.h.b16 %v274
    %v1044 = vunpack.c.l.b16 %v275
    %v1045 = vunpack.c.h.b16 %v275
    %v1046 = vunpack.c.l.b16 %v276
    %v1047 = vunpack.c.h.b16 %v276
    %v1048 = vunpack.c.l.b16 %v277
    %v1049 = vunpack.c.h.b16 %v277
    %v1050 = vunpack.c.l.b16 %v278
    %v1051 = vunpack.c.h.b16 %v278
    %v1052 = vunpack.c.l.b16 %v279
    %v1053 = vunpack.c.h.b16 %v279
    %v1054 = vunpack.c.l.b16 %v280
    %v1055 = vunpack.c.h.b16 %v280
    %v1056 = vunpack.c.l.b16 %v281
    %v1057 = vunpack.c.h.b16 %v281
    %v1058 = vunpack.c.l.b16 %v282
    %v1059 = vunpack.c.h.b16 %v282
    %v1060 = vunpack.c.l.b16 %v283
    %v1061 = vunpack.c.h.b16 %v283
    %v1062 = vunpack.c.l.b16 %v284
    %v1063 = vunpack.c.h.b16 %v284
    %v1064 = vunpack.c.l.b16 %v285
    %v1065 = vunpack.c.h.b16 %v285
    %v1066 = vunpack.c.l.b16 %v286
    %v1067 = vunpack.c.h.b16 %v286
    %v1068 = vunpack.c.l.b16 %v287
    %v1069 = vunpack.c.h.b16 %v287
    %v1070 = vunpack.c.l.b16 %v288
    %v1071 = vunpack.c.h.b16 %v288
    %v1072 = vunpack.c.l.b16 %v289
    %v1073 = vunpack.c.h.b16 %v289
    %v1074 = vunpack.c.l.b16 %v290
    %v1075 = vunpack.c.h.b16 %v290
    %v1076 = vunpack.c.l.b16 %v291
    %v1077 = vunpack.c.h.b16 %v291
    %v1078 = vunpack.c.l.b16 %v292
    %v1079 = vunpack.c.h.b16 %v292
    %v1080 = vunpack.c.l.b16 %v293
    %v1081 = vunpack.c.h.b16 %v293
    %v1082 = vunpack.c.l.b16 %v294
    %v1083 = vunpack.c.h.b16 %v294
    %v1084 = vunpack.c.l.b16 %v295
    %v1085 = vunpack.c.h.b16 %v295
    %v1086 = vunpack.c.l.b16 %v296
    %v1087 = vunpack.c.h.b16 %v296
    %v1088 = vunpack.c.l.b16 %v297
    %v1089 = vunpack.c.h.b16 %v297
    %v1090 = vunpack.c.l.b16 %v298
    %v1091 = vunpack.c.h.b16 %v298
    %v1092 = vunpack.c.l.b16 %v299
    %v1093 = vunpack.c.h.b16 %v299
    %v1094 = vunpack.c.l.b16 %v300
    %v1095 = vunpack.c.h.b16 %v300
    %v1096 = vunpack.c.l.b16 %v301
    %v1097 = vunpack.c.h.b16 %v301
    %v1098 = vunpack.c.l.b16 %v302
    %v1099 = vunpack.c.h.b16 %v302
    %v1100 = vunpack.c.l.b16 %v303
    %v1101 = vunpack.c.h.b16 %v303
    %v1102 = vunpack.c.l.b16 %v304
    %v1103 = vunpack.c.h.b16 %v304
    %v1104 = vunpack.c.l.b16 %v305
    %v1105 = vunpack.c.h.b16 %v305
    %v1106 = vunpack.c.l.b16 %v306
    %v1107 = vunpack.c.h.b16 %v306
    %v1108 = vunpack.c.l.b16 %v307
    %v1109 = vunpack.c.h.b16 %v307
    %v1110 = vunpack.c.l.b16 %v308
    %v1111 = vunpack.c.h.b16 %v308
    %v1112 = vunpack.c.l.b16 %v309
    %v1113 = vunpack.c.h.b16 %v309
    %v1114 = vunpack.c.l.b16 %v310
    %v1115 = vunpack.c.h.b16 %v310
    %v1116 = vunpack.c.l.b16 %v311
    %v1117 = vunpack.c.h.b16 %v311
    %v1118 = vunpack.c.l.b16 %v312
    %v1119 = vunpack.c.h.b16 %v312
    %v1120 = vunpack.c.l.b16 %v313
    %v1121 = vunpack.c.h.b16 %v313
    %v1122 = vunpack.c.l.b16 %v314
    %v1123 = vunpack.c.h.b16 %v314
    %v1124 = vunpack.c.l.b16 %v315
    %v1125 = vunpack.c.h.b16 %v315
    %v1126 = vunpack.c.l.b16 %v316
    %v1127 = vunpack.c.h.b16 %v316
    %v1128 = vunpack.c.l.b16 %v317
    %v1129 = vunpack.c.h.b16 %v317
    %v1130 = vunpack.c.l.b16 %v318
    %v1131 = vunpack.c.h.b16 %v318
    %v1132 = vunpack.c.l.b16 %v319
    %v1133 = vunpack.c.h.b16 %v319
    %v1134 = vunpack.c.l.b16 %v320
    %v1135 = vunpack.c.h.b16 %v320
    %v1136 = vunpack.c.l.b16 %v321
    %v1137 = vunpack.c.h.b16 %v321
    %v1138 = vunpack.c.l.b16 %v322
    %v1139 = vunpack.c.h.b16 %v322
    %v1140 = vunpack.c.l.b16 %v323
    %v1141 = vunpack.c.h.b16 %v323
    %v1142 = vunpack.c.l.b16 %v324
    %v1143 = vunpack.c.h.b16 %v324
    %v1144 = vunpack.c.l.b16 %v325
    %v1145 = vunpack.c.h.b16 %v325
    %v1146 = vunpack.c.l.b16 %v326
    %v1147 = vunpack.c.h.b16 %v326
    %v1148 = vunpack.c.l.b16 %v327
    %v1149 = vunpack.c.h.b16 %v327
    %v1150 = vunpack.c.l.b16 %v328
    %v1151 = vunpack.c.h.b16 %v328
    %v1152 = vunpack.c.l.b16 %v329
    %v1153 = vunpack.c.h.b16 %v329
    %v1154 = vunpack.c.l.b16 %v330
    %v1155 = vunpack.c.h.b16 %v330
    %v1156 = vunpack.c.l.b16 %v331
    %v1157 = vunpack.c.h.b16 %v331
    %v1158 = vunpack.c.l.b16 %v332
    %v1159 = vunpack.c.h.b16 %v332
    %v1160 = vunpack.c.l.b16 %v333
    %v1161 = vunpack.c.h.b16 %v333
    %v1162 = vunpack.c.l.b16 %v334
    %v1163 = vunpack.c.h.b16 %v334
    %v1164 = vunpack.c.l.b16 %v335
    %v1165 = vunpack.c.h.b16 %v335
    %v1166 = vunpack.c.l.b16 %v336
    %v1167 = vunpack.c.h.b16 %v336
    %v1168 = vunpack.c.l.b16 %v337
    %v1169 = vunpack.c.h.b16 %v337
    %v1170 = vunpack.c.l.b16 %v338
    %v1171 = vunpack.c.h.b16 %v338
    %v1172 = vunpack.c.l.b16 %v339
    %v1173 = vunpack.c.h.b16 %v339
    %v1174 = vunpack.c.l.b16 %v340
    %v1175 = vunpack.c.h.b16 %v340
    %v1176 = vunpack.c.l.b16 %v341
    %v1177 = vunpack.c.h.b16 %v341
    %v1178 = vunpack.c.l.b16 %v342
    %v1179 = vunpack.c.h.b16 %v342
    %v1180 = vunpack.c.l.b16 %v343
    %v1181 = vunpack.c.h.b16 %v343
    %v1182 = vunpack.c.l.b16 %v344
    %v1183 = vunpack.c.h.b16 %v344
    %v1184 = vunpack.c.l.b16 %v345
    %v1185 = vunpack.c.h.b16 %v345
    %v1186 = vunpack.c.l.b16 %v346
    %v1187 = vunpack.c.h.b16 %v346
    %v1188 = vunpack.c.l.b16 %v347
    %v1189 = vunpack.c.h.b16 %v347
    %v1190 = vunpack.c.l.b16 %v348
    %v1191 = vunpack.c.h.b16 %v348
    %v1192 = vunpack.c.l.b16 %v349
    %v1193 = vunpack.c.h.b16 %v349
    %v1194 = vunpack.c.l.b16 %v350
    %v1195 = vunpack.c.h.b16 %v350
    %v1196 = vunpack.c.l.b16 %v351
    %v1197 = vunpack.c.h.b16 %v351
    %v1198 = vunpack.c.l.b16 %v352
    %v1199 = vunpack.c.h.b16 %v352
    %v1200 = vunpack.c.l.b16 %v353
    %v1201 = vunpack.c.h.b16 %v353
    %v1202 = vpack.c.b16 %v692, %v690
    %v1203 = vpack.c.b16 %v693, %v691
    %v1204 = vpack.c.b16 %v696, %v694
    %v1205 = vpack.c.b16 %v697, %v695
    %v1206 = vpack.c.b16 %v700, %v698
    %v1207 = vpack.c.b16 %v701, %v699
    %v1208 = vpack.c.b16 %v704, %v702
    %v1209 = vpack.c.b16 %v705, %v703
    %v1210 = vpack.c.b16 %v708, %v706
    %v1211 = vpack.c.b16 %v709, %v707
    %v1212 = vpack.c.b16 %v712, %v710
    %v1213 = vpack.c.b16 %v713, %v711
    %v1214 = vpack.c.b16 %v716, %v714
    %v1215 = vpack.c.b16 %v717, %v715
    %v1216 = vpack.c.b16 %v720, %v718
    %v1217 = vpack.c.b16 %v721, %v719
    %v1218 = vpack.c.b16 %v724, %v722
    %v1219 = vpack.c.b16 %v725, %v723
    %v1220 = vpack.c.b16 %v728, %v726
    %v1221 = vpack.c.b16 %v729, %v727
    %v1222 = vpack.c.b16 %v732, %v730
    %v1223 = vpack.c.b16 %v733, %v731
    %v1224 = vpack.c.b16 %v736, %v734
    %v1225 = vpack.c.b16 %v737, %v735
    %v1226 = vpack.c.b16 %v740, %v738
    %v1227 = vpack.c.b16 %v741, %v739
    %v1228 = vpack.c.b16 %v744, %v742
    %v1229 = vpack.c.b16 %v745, %v743
    %v1230 = vpack.c.b16 %v748, %v746
    %v1231 = vpack.c.b16 %v749, %v747
    %v1232 = vpack.c.b16 %v752, %v750
    %v1233 = vpack.c.b16 %v753, %v751
    %v1234 = vpack.c.b16 %v756, %v754
    %v1235 = vpack.c.b16 %v757, %v755
    %v1236 = vpack.c.b16 %v760, %v758
    %v1237 = vpack.c.b16 %v761, %v759
    %v1238 = vpack.c.b16 %v764, %v762
    %v1239 = vpack.c.b16 %v765, %v763
    %v1240 = vpack.c.b16 %v768, %v766
    %v1241 = vpack.c.b16 %v769, %v767
    %v1242 = vpack.c.b16 %v772, %v770
    %v1243 = vpack.c.b16 %v773, %v771
    %v1244 = vpack.c.b16 %v776, %v774
    %v1245 = vpack.c.b16 %v777, %v775
    %v1246 = vpack.c.b16 %v780, %v778
    %v1247 = vpack.c.b16 %v781, %v779
    %v1248 = vpack.c.b16 %v784, %v782
    %v1249 = vpack.c.b16 %v785, %v783
    %v1250 = vpack.c.b16 %v788, %v786
    %v1251 = vpack.c.b16 %v789, %v787
    %v1252 = vpack.c.b16 %v792, %v790
    %v1253 = vpack.c.b16 %v793, %v791
    %v1254 = vpack.c.b16 %v796, %v794
    %v1255 = vpack.c.b16 %v797, %v795
    %v1256 = vpack.c.b16 %v800, %v798
    %v1257 = vpack.c.b16 %v801, %v799
    %v1258 = vpack.c.b16 %v804, %v802
    %v1259 = vpack.c.b16 %v805, %v803
    %v1260 = vpack.c.b16 %v808, %v806
    %v1261 = vpack.c.b16 %v809, %v807
    %v1262 = vpack.c.b16 %v812, %v810
    %v1263 = vpack.c.b16 %v813, %v811
    %v1264 = vpack.c.b16 %v816, %v814
    %v1265 = vpack.c.b16 %v817, %v815
    %v1266 = vpack.c.b16 %v820, %v818
    %v1267 = vpack.c.b16 %v821, %v819
    %v1268 = vpack.c.b16 %v824, %v822
    %v1269 = vpack.c.b16 %v825, %v823
    %v1270 = vpack.c.b16 %v828, %v826
    %v1271 = vpack.c.b16 %v829, %v827
    %v1272 = vpack.c.b16 %v832, %v830
    %v1273 = vpack.c.b16 %v833, %v831
    %v1274 = vpack.c.b16 %v836, %v834
    %v1275 = vpack.c.b16 %v837, %v835
    %v1276 = vpack.c.b16 %v840, %v838
    %v1277 = vpack.c.b16 %v841, %v839
    %v1278 = vpack.c.b16 %v844, %v842
    %v1279 = vpack.c.b16 %v845, %v843
    %v1280 = vpack.c.b16 %v848, %v846
    %v1281 = vpack.c.b16 %v849, %v847
    %v1282 = vpack.c.b16 %v852, %v850
    %v1283 = vpack.c.b16 %v853, %v851
    %v1284 = vpack.c.b16 %v856, %v854
    %v1285 = vpack.c.b16 %v857, %v855
    %v1286 = vpack.c.b16 %v860, %v858
    %v1287 = vpack.c.b16 %v861, %v859
    %v1288 = vpack.c.b16 %v864, %v862
    %v1289 = vpack.c.b16 %v865, %v863
    %v1290 = vpack.c.b16 %v868, %v866
    %v1291 = vpack.c.b16 %v869, %v867
    %v1292 = vpack.c.b16 %v872, %v870
    %v1293 = vpack.c.b16 %v873, %v871
    %v1294 = vpack.c.b16 %v876, %v874
    %v1295 = vpack.c.b16 %v877, %v875
    %v1296 = vpack.c.b16 %v880, %v878
    %v1297 = vpack.c.b16 %v881, %v879
    %v1298 = vpack.c.b16 %v884, %v882
    %v1299 = vpack.c.b16 %v885, %v883
    %v1300 = vpack.c.b16 %v888, %v886
    %v1301 = vpack.c.b16 %v889, %v887
    %v1302 = vpack.c.b16 %v892, %v890
    %v1303 = vpack.c.b16 %v893, %v891
    %v1304 = vpack.c.b16 %v896, %v894
    %v1305 = vpack.c.b16 %v897, %v895
    %v1306 = vpack.c.b16 %v900, %v898
    %v1307 = vpack.c.b16 %v901, %v899
    %v1308 = vpack.c.b16 %v904, %v902
    %v1309 = vpack.c.b16 %v905, %v903
    %v1310 = vpack.c.b16 %v908, %v906
    %v1311 = vpack.c.b16 %v909, %v907
    %v1312 = vpack.c.b16 %v912, %v910
    %v1313 = vpack.c.b16 %v913, %v911
    %v1314 = vpack.c.b16 %v916, %v914
    %v1315 = vpack.c.b16 %v917, %v915
    %v1316 = vpack.c.b16 %v920, %v918
    %v1317 = vpack.c.b16 %v921, %v919
    %v1318 = vpack.c.b16 %v924, %v922
    %v1319 = vpack.c.b16 %v925, %v923
    %v1320 = vpack.c.b16 %v928, %v926
    %v1321 = vpack.c.b16 %v929, %v927
    %v1322 = vpack.c.b16 %v932, %v930
    %v1323 = vpack.c.b16 %v933, %v931
    %v1324 = vpack.c.b16 %v936, %v934
    %v1325 = vpack.c.b16 %v937, %v935
    %v1326 = vpack.c.b16 %v940, %v938
    %v1327 = vpack.c.b16 %v941, %v939
    %v1328 = vpack.c.b16 %v944, %v942
    %v1329 = vpack.c.b16 %v945, %v943
    %v1330 = vpack.c.b16 %v948, %v946
    %v1331 = vpack.c.b16 %v949, %v947
    %v1332 = vpack.c.b16 %v952, %v950
    %v1333 = vpack.c.b16 %v953, %v951
    %v1334 = vpack.c.b16 %v956, %v954
    %v1335 = vpack.c.b16 %v957, %v955
    %v1336 = vpack.c.b16 %v960, %v958
    %v1337 = vpack.c.b16 %v961, %v959
    %v1338 = vpack.c.b16 %v964, %v962
    %v1339 = vpack.c.b16 %v965, %v963
    %v1340 = vpack.c.b16 %v968, %v966
    %v1341 = vpack.c.b16 %v969, %v967
    %v1342 = vpack.c.b16 %v972, %v970
    %v1343 = vpack.c.b16 %v973, %v971
    %v1344 = vpack.c.b16 %v976, %v974
    %v1345 = vpack.c.b16 %v977, %v975
    %v1346 = vpack.c.b16 %v980, %v978
    %v1347 = vpack.c.b16 %v981, %v979
    %v1348 = vpack.c.b16 %v984, %v982
    %v1349 = vpack.c.b16 %v985, %v983
    %v1350 = vpack.c.b16 %v988, %v986
    %v1351 = vpack.c.b16 %v989, %v987
    %v1352 = vpack.c.b16 %v992, %v990
    %v1353 = vpack.c.b16 %v993, %v991
    %v1354 = vpack.c.b16 %v996, %v994
    %v1355 = vpack.c.b16 %v997, %v995
    %v1356 = vpack.c.b16 %v1000, %v998
    %v1357 = vpack.c.b16 %v1001, %v999
    %v1358 = vpack.c.b16 %v1004, %v1002
    %v1359 = vpack.c.b16 %v1005, %v1003
    %v1360 = vpack.c.b16 %v1008, %v1006
    %v1361 = vpack.c.b16 %v1009, %v1007
    %v1362 = vpack.c.b16 %v1012, %v1010
    %v1363 = vpack.c.b16 %v1013, %v1011
    %v1364 = vpack.c.b16 %v1016, %v1014
    %v1365 = vpack.c.b16 %v1017, %v1015
    %v1366 = vpack.c.b16 %v1020, %v1018
    %v1367 = vpack.c.b16 %v1021, %v1019
    %v1368 = vpack.c.b16 %v1024, %v1022
    %v1369 = vpack.c.b16 %v1025, %v1023
    %v1370 = vpack.c.b16 %v1028, %v1026
    %v1371 = vpack.c.b16 %v1029, %v1027
    %v1372 = vpack.c.b16 %v1032, %v1030
    %v1373 = vpack.c.b16 %v1033, %v1031
    %v1374 = vpack.c.b16 %v1036, %v1034
    %v1375 = vpack.c.b16 %v1037, %v1035
    %v1376 = vpack.c.b16 %v1040, %v1038
    %v1377 = vpack.c.b16 %v1041, %v1039
    %v1378 = vpack.c.b16 %v1044, %v1042
    %v1379 = vpack.c.b16 %v1045, %v1043
    %v1380 = vpack.c.b16 %v1048, %v1046
    %v1381 = vpack.c.b16 %v1049, %v1047
    %v1382 = vpack.c.b16 %v1052, %v1050
    %v1383 = vpack.c.b16 %v1053, %v1051
    %v1384 = vpack.c.b16 %v1056, %v1054
    %v1385 = vpack.c.b16 %v1057, %v1055
    %v1386 = vpack.c.b16 %v1060, %v1058
    %v1387 = vpack.c.b16 %v1061, %v1059
    %v1388 = vpack.c.b16 %v1064, %v1062
    %v1389 = vpack.c.b16 %v1065, %v1063
    %v1390 = vpack.c.b16 %v1068, %v1066
    %v1391 = vpack.c.b16 %v1069, %v1067
    %v1392 = vpack.c.b16 %v1072, %v1070
    %v1393 = vpack.c.b16 %v1073, %v1071
    %v1394 = vpack.c.b16 %v1076, %v1074
    %v1395 = vpack.c.b16 %v1077, %v1075
    %v1396 = vpack.c.b16 %v1080, %v1078
    %v1397 = vpack.c.b16 %v1081, %v1079
    %v1398 = vpack.c.b16 %v1084, %v1082
    %v1399 = vpack.c.b16 %v1085, %v1083
    %v1400 = vpack.c.b16 %v1088, %v1086
    %v1401 = vpack.c.b16 %v1089, %v1087
    %v1402 = vpack.c.b16 %v1092, %v1090
    %v1403 = vpack.c.b16 %v1093, %v1091
    %v1404 = vpack.c.b16 %v1096, %v1094
    %v1405 = vpack.c.b16 %v1097, %v1095
    %v1406 = vpack.c.b16 %v1100, %v1098
    %v1407 = vpack.c.b16 %v1101, %v1099
    %v1408 = vpack.c.b16 %v1104, %v1102
    %v1409 = vpack.c.b16 %v1105, %v1103
    %v1410 = vpack.c.b16 %v1108, %v1106
    %v1411 = vpack.c.b16 %v1109, %v1107
    %v1412 = vpack.c.b16 %v1112, %v1110
    %v1413 = vpack.c.b16 %v1113, %v1111
    %v1414 = vpack.c.b16 %v1116, %v1114
    %v1415 = vpack.c.b16 %v1117, %v1115
    %v1416 = vpack.c.b16 %v1120, %v1118
    %v1417 = vpack.c.b16 %v1121, %v1119
    %v1418 = vpack.c.b16 %v1124, %v1122
    %v1419 = vpack.c.b16 %v1125, %v1123
    %v1420 = vpack.c.b16 %v1128, %v1126
    %v1421 = vpack.c.b16 %v1129, %v1127
    %v1422 = vpack.c.b16 %v1132, %v1130
    %v1423 = vpack.c.b16 %v1133, %v1131
    %v1424 = vpack.c.b16 %v1136, %v1134
    %v1425 = vpack.c.b16 %v1137, %v1135
    %v1426 = vpack.c.b16 %v1140, %v1138
    %v1427 = vpack.c.b16 %v1141, %v1139
    %v1428 = vpack.c.b16 %v1144, %v1142
    %v1429 = vpack.c.b16 %v1145, %v1143
    %v1430 = vpack.c.b16 %v1148, %v1146
    %v1431 = vpack.c.b16 %v1149, %v1147
    %v1432 = vpack.c.b16 %v1152, %v1150
    %v1433 = vpack.c.b16 %v1153, %v1151
    %v1434 = vpack.c.b16 %v1156, %v1154
    %v1435 = vpack.c.b16 %v1157, %v1155
    %v1436 = vpack.c.b16 %v1160, %v1158
    %v1437 = vpack.c.b16 %v1161, %v1159
    %v1438 = vpack.c.b16 %v1164, %v1162
    %v1439 = vpack.c.b16 %v1165, %v1163
    %v1440 = vpack.c.b16 %v1168, %v1166
    %v1441 = vpack.c.b16 %v1169, %v1167
    %v1442 = vpack.c.b16 %v1172, %v1170
    %v1443 = vpack.c.b16 %v1173, %v1171
    %v1444 = vpack.c.b16 %v1176, %v1174
    %v1445 = vpack.c.b16 %v1177, %v1175
    %v1446 = vpack.c.b16 %v1180, %v1178
    %v1447 = vpack.c.b16 %v1181, %v1179
    %v1448 = vpack.c.b16 %v1184, %v1182
    %v1449 = vpack.c.b16 %v1185, %v1183
    %v1450 = vpack.c.b16 %v1188, %v1186
    %v1451 = vpack.c.b16 %v1189, %v1187
    %v1452 = vpack.c.b16 %v1192, %v1190
    %v1453 = vpack.c.b16 %v1193, %v1191
    %v1454 = vpack.c.b16 %v1196, %v1194
    %v1455 = vpack.c.b16 %v1197, %v1195
    %v1456 = vpack.c.b16 %v1200, %v1198
    %v1457 = vpack.c.b16 %v1201, %v1199
    %1714 = vmatpush.bf16.msra.mxu0 %v1216
    %1715 = vmatpush.bf16.msra.mxu0 %v1214
    %1716 = vmatpush.bf16.msra.mxu0 %v1212
    %1717 = vmatpush.bf16.msra.mxu0 %v1210
    %1718 = vmatpush.bf16.msra.mxu0 %v1208
    %1719 = vmatpush.bf16.msra.mxu0 %v1206
    %1720 = vmatpush.bf16.msra.mxu0 %v1204
    %1721 = vmatpush.bf16.msra.mxu0 %v1202
    %1722 = vmatmul.bf16.gmra.mxu0 %v402
    %v1723 = vpop.f32.mrf.mxu0
    %v1724 = vadd.f32 0.0, %v1723
    %v1725 = vpop.f32.mrf.mxu0
    %v1726 = vadd.f32 0.0, %v1725
    %1727 = vdwg.mxu0
    %1728 = vmatpush.bf16.msra.mxu0 %v1232
    %1729 = vmatpush.bf16.msra.mxu0 %v1230
    %1730 = vmatpush.bf16.msra.mxu0 %v1228
    %1731 = vmatpush.bf16.msra.mxu0 %v1226
    %1732 = vmatpush.bf16.msra.mxu0 %v1224
    %1733 = vmatpush.bf16.msra.mxu0 %v1222
    %1734 = vmatpush.bf16.msra.mxu0 %v1220
    %1735 = vmatpush.bf16.msra.mxu0 %v1218
    %1736 = vmatmul.bf16.gmra.mxu0 %v403
    %v1737 = vpop.f32.mrf.mxu0
    %v1738 = vadd.f32 %v1724, %v1737
    %v1739 = vpop.f32.mrf.mxu0
    %v1740 = vadd.f32 %v1726, %v1739
    %1741 = vdwg.mxu0
    %1742 = vmatpush.bf16.msra.mxu0 %v1248
    %1743 = vmatpush.bf16.msra.mxu0 %v1246
    %1744 = vmatpush.bf16.msra.mxu0 %v1244
    %1745 = vmatpush.bf16.msra.mxu0 %v1242
    %1746 = vmatpush.bf16.msra.mxu0 %v1240
    %1747 = vmatpush.bf16.msra.mxu0 %v1238
    %1748 = vmatpush.bf16.msra.mxu0 %v1236
    %1749 = vmatpush.bf16.msra.mxu0 %v1234
    %1750 = vmatmul.bf16.gmra.mxu0 %v404
    %v1751 = vpop.f32.mrf.mxu0
    %v1752 = vadd.f32 %v1738, %v1751
    %v1753 = vpop.f32.mrf.mxu0
    %v1754 = vadd.f32 %v1740, %v1753
    %1755 = vdwg.mxu0
    %1756 = vmatpush.bf16.msra.mxu0 %v1264
    %1757 = vmatpush.bf16.msra.mxu0 %v1262
    %1758 = vmatpush.bf16.msra.mxu0 %v1260
    %1759 = vmatpush.bf16.msra.mxu0 %v1258
    %1760 = vmatpush.bf16.msra.mxu0 %v1256
    %1761 = vmatpush.bf16.msra.mxu0 %v1254
    %1762 = vmatpush.bf16.msra.mxu0 %v1252
    %1763 = vmatpush.bf16.msra.mxu0 %v1250
    %1764 = vmatmul.bf16.gmra.mxu0 %v405
    %v1765 = vpop.f32.mrf.mxu0
    %v1766 = vadd.f32 %v1752, %v1765
    %v1767 = vpop.f32.mrf.mxu0
    %v1768 = vadd.f32 %v1754, %v1767
    %1769 = vdwg.mxu0
    %1770 = vmatpush.bf16.msra.mxu0 %v1280
    %1771 = vmatpush.bf16.msra.mxu0 %v1278
    %1772 = vmatpush.bf16.msra.mxu0 %v1276
    %1773 = vmatpush.bf16.msra.mxu0 %v1274
    %1774 = vmatpush.bf16.msra.mxu0 %v1272
    %1775 = vmatpush.bf16.msra.mxu0 %v1270
    %1776 = vmatpush.bf16.msra.mxu0 %v1268
    %1777 = vmatpush.bf16.msra.mxu0 %v1266
    %1778 = vmatmul.bf16.gmra.mxu0 %v406
    %v1779 = vpop.f32.mrf.mxu0
    %v1780 = vadd.f32 %v1766, %v1779
    %v1781 = vpop.f32.mrf.mxu0
    %v1782 = vadd.f32 %v1768, %v1781
    %1783 = vdwg.mxu0
    %1784 = vmatpush.bf16.msra.mxu0 %v1296
    %1785 = vmatpush.bf16.msra.mxu0 %v1294
    %1786 = vmatpush.bf16.msra.mxu0 %v1292
    %1787 = vmatpush.bf16.msra.mxu0 %v1290
    %1788 = vmatpush.bf16.msra.mxu0 %v1288
    %1789 = vmatpush.bf16.msra.mxu0 %v1286
    %1790 = vmatpush.bf16.msra.mxu0 %v1284
    %1791 = vmatpush.bf16.msra.mxu0 %v1282
    %1792 = vmatmul.bf16.gmra.mxu0 %v407
    %v1793 = vpop.f32.mrf.mxu0
    %v1794 = vadd.f32 %v1780, %v1793
    %v1795 = vpop.f32.mrf.mxu0
    %v1796 = vadd.f32 %v1782, %v1795
    %1797 = vdwg.mxu0
    %1798 = vmatpush.bf16.msra.mxu0 %v1312
    %1799 = vmatpush.bf16.msra.mxu0 %v1310
    %1800 = vmatpush.bf16.msra.mxu0 %v1308
    %1801 = vmatpush.bf16.msra.mxu0 %v1306
    %1802 = vmatpush.bf16.msra.mxu0 %v1304
    %1803 = vmatpush.bf16.msra.mxu0 %v1302
    %1804 = vmatpush.bf16.msra.mxu0 %v1300
    %1805 = vmatpush.bf16.msra.mxu0 %v1298
    %1806 = vmatmul.bf16.gmra.mxu0 %v408
    %v1807 = vpop.f32.mrf.mxu0
    %v1808 = vadd.f32 %v1794, %v1807
    %v1809 = vpop.f32.mrf.mxu0
    %v1810 = vadd.f32 %v1796, %v1809
    %1811 = vdwg.mxu0
    %1812 = vmatpush.bf16.msra.mxu0 %v1328
    %1813 = vmatpush.bf16.msra.mxu0 %v1326
    %1814 = vmatpush.bf16.msra.mxu0 %v1324
    %1815 = vmatpush.bf16.msra.mxu0 %v1322
    %1816 = vmatpush.bf16.msra.mxu0 %v1320
    %1817 = vmatpush.bf16.msra.mxu0 %v1318
    %1818 = vmatpush.bf16.msra.mxu0 %v1316
    %1819 = vmatpush.bf16.msra.mxu0 %v1314
    %1820 = vmatmul.bf16.gmra.mxu0 %v409
    %v1821 = vpop.f32.mrf.mxu0
    %v1822 = vadd.f32 %v1808, %v1821
    %v1823 = vpop.f32.mrf.mxu0
    %v1824 = vadd.f32 %v1810, %v1823
    %1825 = vdwg.mxu0
    %1826 = vmatpush.bf16.msra.mxu0 %v1344
    %1827 = vmatpush.bf16.msra.mxu0 %v1342
    %1828 = vmatpush.bf16.msra.mxu0 %v1340
    %1829 = vmatpush.bf16.msra.mxu0 %v1338
    %1830 = vmatpush.bf16.msra.mxu0 %v1336
    %1831 = vmatpush.bf16.msra.mxu0 %v1334
    %1832 = vmatpush.bf16.msra.mxu0 %v1332
    %1833 = vmatpush.bf16.msra.mxu0 %v1330
    %1834 = vmatmul.bf16.gmra.mxu0 %v410
    %v1835 = vpop.f32.mrf.mxu0
    %v1836 = vadd.f32 %v1822, %v1835
    %v1837 = vpop.f32.mrf.mxu0
    %v1838 = vadd.f32 %v1824, %v1837
    %1839 = vdwg.mxu0
    %1840 = vmatpush.bf16.msra.mxu0 %v1360
    %1841 = vmatpush.bf16.msra.mxu0 %v1358
    %1842 = vmatpush.bf16.msra.mxu0 %v1356
    %1843 = vmatpush.bf16.msra.mxu0 %v1354
    %1844 = vmatpush.bf16.msra.mxu0 %v1352
    %1845 = vmatpush.bf16.msra.mxu0 %v1350
    %1846 = vmatpush.bf16.msra.mxu0 %v1348
    %1847 = vmatpush.bf16.msra.mxu0 %v1346
    %1848 = vmatmul.bf16.gmra.mxu0 %v411
    %v1849 = vpop.f32.mrf.mxu0
    %v1850 = vadd.f32 %v1836, %v1849
    %v1851 = vpop.f32.mrf.mxu0
    %v1852 = vadd.f32 %v1838, %v1851
    %1853 = vdwg.mxu0
    %1854 = vmatpush.bf16.msra.mxu0 %v1376
    %1855 = vmatpush.bf16.msra.mxu0 %v1374
    %1856 = vmatpush.bf16.msra.mxu0 %v1372
    %1857 = vmatpush.bf16.msra.mxu0 %v1370
    %1858 = vmatpush.bf16.msra.mxu0 %v1368
    %1859 = vmatpush.bf16.msra.mxu0 %v1366
    %1860 = vmatpush.bf16.msra.mxu0 %v1364
    %1861 = vmatpush.bf16.msra.mxu0 %v1362
    %1862 = vmatmul.bf16.gmra.mxu0 %v412
    %v1863 = vpop.f32.mrf.mxu0
    %v1864 = vadd.f32 %v1850, %v1863
    %v1865 = vpop.f32.mrf.mxu0
    %v1866 = vadd.f32 %v1852, %v1865
    %1867 = vdwg.mxu0
    %1868 = vmatpush.bf16.msra.mxu0 %v1392
    %1869 = vmatpush.bf16.msra.mxu0 %v1390
    %1870 = vmatpush.bf16.msra.mxu0 %v1388
    %1871 = vmatpush.bf16.msra.mxu0 %v1386
    %1872 = vmatpush.bf16.msra.mxu0 %v1384
    %1873 = vmatpush.bf16.msra.mxu0 %v1382
    %1874 = vmatpush.bf16.msra.mxu0 %v1380
    %1875 = vmatpush.bf16.msra.mxu0 %v1378
    %1876 = vmatmul.bf16.gmra.mxu0 %v413
    %v1877 = vpop.f32.mrf.mxu0
    %v1878 = vadd.f32 %v1864, %v1877
    %v1879 = vpop.f32.mrf.mxu0
    %v1880 = vadd.f32 %v1866, %v1879
    %1881 = vdwg.mxu0
    %1882 = vmatpush.bf16.msra.mxu0 %v1408
    %1883 = vmatpush.bf16.msra.mxu0 %v1406
    %1884 = vmatpush.bf16.msra.mxu0 %v1404
    %1885 = vmatpush.bf16.msra.mxu0 %v1402
    %1886 = vmatpush.bf16.msra.mxu0 %v1400
    %1887 = vmatpush.bf16.msra.mxu0 %v1398
    %1888 = vmatpush.bf16.msra.mxu0 %v1396
    %1889 = vmatpush.bf16.msra.mxu0 %v1394
    %1890 = vmatmul.bf16.gmra.mxu0 %v414
    %v1891 = vpop.f32.mrf.mxu0
    %v1892 = vadd.f32 %v1878, %v1891
    %v1893 = vpop.f32.mrf.mxu0
    %v1894 = vadd.f32 %v1880, %v1893
    %1895 = vdwg.mxu0
    %1896 = vmatpush.bf16.msra.mxu0 %v1424
    %1897 = vmatpush.bf16.msra.mxu0 %v1422
    %1898 = vmatpush.bf16.msra.mxu0 %v1420
    %1899 = vmatpush.bf16.msra.mxu0 %v1418
    %1900 = vmatpush.bf16.msra.mxu0 %v1416
    %1901 = vmatpush.bf16.msra.mxu0 %v1414
    %1902 = vmatpush.bf16.msra.mxu0 %v1412
    %1903 = vmatpush.bf16.msra.mxu0 %v1410
    %1904 = vmatmul.bf16.gmra.mxu0 %v415
    %v1905 = vpop.f32.mrf.mxu0
    %v1906 = vadd.f32 %v1892, %v1905
    %v1907 = vpop.f32.mrf.mxu0
    %v1908 = vadd.f32 %v1894, %v1907
    %1909 = vdwg.mxu0
    %1910 = vmatpush.bf16.msra.mxu0 %v1440
    %1911 = vmatpush.bf16.msra.mxu0 %v1438
    %1912 = vmatpush.bf16.msra.mxu0 %v1436
    %1913 = vmatpush.bf16.msra.mxu0 %v1434
    %1914 = vmatpush.bf16.msra.mxu0 %v1432
    %1915 = vmatpush.bf16.msra.mxu0 %v1430
    %1916 = vmatpush.bf16.msra.mxu0 %v1428
    %1917 = vmatpush.bf16.msra.mxu0 %v1426
    %1918 = vmatmul.bf16.gmra.mxu0 %v416
    %v1919 = vpop.f32.mrf.mxu0
    %v1920 = vadd.f32 %v1906, %v1919
    %v1921 = vpop.f32.mrf.mxu0
    %v1922 = vadd.f32 %v1908, %v1921
    %1923 = vdwg.mxu0
    %1924 = vmatpush.bf16.msra.mxu0 %v1456
    %1925 = vmatpush.bf16.msra.mxu0 %v1454
    %1926 = vmatpush.bf16.msra.mxu0 %v1452
    %1927 = vmatpush.bf16.msra.mxu0 %v1450
    %1928 = vmatpush.bf16.msra.mxu0 %v1448
    %1929 = vmatpush.bf16.msra.mxu0 %v1446
    %1930 = vmatpush.bf16.msra.mxu0 %v1444
    %1931 = vmatpush.bf16.msra.mxu0 %v1442
    %1932 = vmatmul.bf16.gmra.mxu0 %v417
    %v1933 = vpop.f32.mrf.mxu0
    %v1934 = vadd.f32 %v1920, %v1933
    %v1935 = vpop.f32.mrf.mxu0
    %v1936 = vadd.f32 %v1922, %v1935
    %1937 = vdwg.mxu0
    %1938 = vmatpush.bf16.msra.mxu0 %v1217
    %1939 = vmatpush.bf16.msra.mxu0 %v1215
    %1940 = vmatpush.bf16.msra.mxu0 %v1213
    %1941 = vmatpush.bf16.msra.mxu0 %v1211
    %1942 = vmatpush.bf16.msra.mxu0 %v1209
    %1943 = vmatpush.bf16.msra.mxu0 %v1207
    %1944 = vmatpush.bf16.msra.mxu0 %v1205
    %1945 = vmatpush.bf16.msra.mxu0 %v1203
    %1946 = vmatmul.bf16.gmra.mxu0 %v402
    %v1947 = vpop.f32.mrf.mxu0
    %v1948 = vadd.f32 0.0, %v1947
    %v1949 = vpop.f32.mrf.mxu0
    %v1950 = vadd.f32 0.0, %v1949
    %1951 = vdwg.mxu0
    %1952 = vmatpush.bf16.msra.mxu0 %v1233
    %1953 = vmatpush.bf16.msra.mxu0 %v1231
    %1954 = vmatpush.bf16.msra.mxu0 %v1229
    %1955 = vmatpush.bf16.msra.mxu0 %v1227
    %1956 = vmatpush.bf16.msra.mxu0 %v1225
    %1957 = vmatpush.bf16.msra.mxu0 %v1223
    %1958 = vmatpush.bf16.msra.mxu0 %v1221
    %1959 = vmatpush.bf16.msra.mxu0 %v1219
    %1960 = vmatmul.bf16.gmra.mxu0 %v403
    %v1961 = vpop.f32.mrf.mxu0
    %v1962 = vadd.f32 %v1948, %v1961
    %v1963 = vpop.f32.mrf.mxu0
    %v1964 = vadd.f32 %v1950, %v1963
    %1965 = vdwg.mxu0
    %1966 = vmatpush.bf16.msra.mxu0 %v1249
    %1967 = vmatpush.bf16.msra.mxu0 %v1247
    %1968 = vmatpush.bf16.msra.mxu0 %v1245
    %1969 = vmatpush.bf16.msra.mxu0 %v1243
    %1970 = vmatpush.bf16.msra.mxu0 %v1241
    %1971 = vmatpush.bf16.msra.mxu0 %v1239
    %1972 = vmatpush.bf16.msra.mxu0 %v1237
    %1973 = vmatpush.bf16.msra.mxu0 %v1235
    %1974 = vmatmul.bf16.gmra.mxu0 %v404
    %v1975 = vpop.f32.mrf.mxu0
    %v1976 = vadd.f32 %v1962, %v1975
    %v1977 = vpop.f32.mrf.mxu0
    %v1978 = vadd.f32 %v1964, %v1977
    %1979 = vdwg.mxu0
    %1980 = vmatpush.bf16.msra.mxu0 %v1265
    %1981 = vmatpush.bf16.msra.mxu0 %v1263
    %1982 = vmatpush.bf16.msra.mxu0 %v1261
    %1983 = vmatpush.bf16.msra.mxu0 %v1259
    %1984 = vmatpush.bf16.msra.mxu0 %v1257
    %1985 = vmatpush.bf16.msra.mxu0 %v1255
    %1986 = vmatpush.bf16.msra.mxu0 %v1253
    %1987 = vmatpush.bf16.msra.mxu0 %v1251
    %1988 = vmatmul.bf16.gmra.mxu0 %v405
    %v1989 = vpop.f32.mrf.mxu0
    %v1990 = vadd.f32 %v1976, %v1989
    %v1991 = vpop.f32.mrf.mxu0
    %v1992 = vadd.f32 %v1978, %v1991
    %1993 = vdwg.mxu0
    %1994 = vmatpush.bf16.msra.mxu0 %v1281
    %1995 = vmatpush.bf16.msra.mxu0 %v1279
    %1996 = vmatpush.bf16.msra.mxu0 %v1277
    %1997 = vmatpush.bf16.msra.mxu0 %v1275
    %1998 = vmatpush.bf16.msra.mxu0 %v1273
    %1999 = vmatpush.bf16.msra.mxu0 %v1271
    %2000 = vmatpush.bf16.msra.mxu0 %v1269
    %2001 = vmatpush.bf16.msra.mxu0 %v1267
    %2002 = vmatmul.bf16.gmra.mxu0 %v406
    %v2003 = vpop.f32.mrf.mxu0
    %v2004 = vadd.f32 %v1990, %v2003
    %v2005 = vpop.f32.mrf.mxu0
    %v2006 = vadd.f32 %v1992, %v2005
    %2007 = vdwg.mxu0
    %2008 = vmatpush.bf16.msra.mxu0 %v1297
    %2009 = vmatpush.bf16.msra.mxu0 %v1295
    %2010 = vmatpush.bf16.msra.mxu0 %v1293
    %2011 = vmatpush.bf16.msra.mxu0 %v1291
    %2012 = vmatpush.bf16.msra.mxu0 %v1289
    %2013 = vmatpush.bf16.msra.mxu0 %v1287
    %2014 = vmatpush.bf16.msra.mxu0 %v1285
    %2015 = vmatpush.bf16.msra.mxu0 %v1283
    %2016 = vmatmul.bf16.gmra.mxu0 %v407
    %v2017 = vpop.f32.mrf.mxu0
    %v2018 = vadd.f32 %v2004, %v2017
    %v2019 = vpop.f32.mrf.mxu0
    %v2020 = vadd.f32 %v2006, %v2019
    %2021 = vdwg.mxu0
    %2022 = vmatpush.bf16.msra.mxu0 %v1313
    %2023 = vmatpush.bf16.msra.mxu0 %v1311
    %2024 = vmatpush.bf16.msra.mxu0 %v1309
    %2025 = vmatpush.bf16.msra.mxu0 %v1307
    %2026 = vmatpush.bf16.msra.mxu0 %v1305
    %2027 = vmatpush.bf16.msra.mxu0 %v1303
    %2028 = vmatpush.bf16.msra.mxu0 %v1301
    %2029 = vmatpush.bf16.msra.mxu0 %v1299
    %2030 = vmatmul.bf16.gmra.mxu0 %v408
    %v2031 = vpop.f32.mrf.mxu0
    %v2032 = vadd.f32 %v2018, %v2031
    %v2033 = vpop.f32.mrf.mxu0
    %v2034 = vadd.f32 %v2020, %v2033
    %2035 = vdwg.mxu0
    %2036 = vmatpush.bf16.msra.mxu0 %v1329
    %2037 = vmatpush.bf16.msra.mxu0 %v1327
    %2038 = vmatpush.bf16.msra.mxu0 %v1325
    %2039 = vmatpush.bf16.msra.mxu0 %v1323
    %2040 = vmatpush.bf16.msra.mxu0 %v1321
    %2041 = vmatpush.bf16.msra.mxu0 %v1319
    %2042 = vmatpush.bf16.msra.mxu0 %v1317
    %2043 = vmatpush.bf16.msra.mxu0 %v1315
    %2044 = vmatmul.bf16.gmra.mxu0 %v409
    %v2045 = vpop.f32.mrf.mxu0
    %v2046 = vadd.f32 %v2032, %v2045
    %v2047 = vpop.f32.mrf.mxu0
    %v2048 = vadd.f32 %v2034, %v2047
    %2049 = vdwg.mxu0
    %2050 = vmatpush.bf16.msra.mxu0 %v1345
    %2051 = vmatpush.bf16.msra.mxu0 %v1343
    %2052 = vmatpush.bf16.msra.mxu0 %v1341
    %2053 = vmatpush.bf16.msra.mxu0 %v1339
    %2054 = vmatpush.bf16.msra.mxu0 %v1337
    %2055 = vmatpush.bf16.msra.mxu0 %v1335
    %2056 = vmatpush.bf16.msra.mxu0 %v1333
    %2057 = vmatpush.bf16.msra.mxu0 %v1331
    %2058 = vmatmul.bf16.gmra.mxu0 %v410
    %v2059 = vpop.f32.mrf.mxu0
    %v2060 = vadd.f32 %v2046, %v2059
    %v2061 = vpop.f32.mrf.mxu0
    %v2062 = vadd.f32 %v2048, %v2061
    %2063 = vdwg.mxu0
    %2064 = vmatpush.bf16.msra.mxu0 %v1361
    %2065 = vmatpush.bf16.msra.mxu0 %v1359
    %2066 = vmatpush.bf16.msra.mxu0 %v1357
    %2067 = vmatpush.bf16.msra.mxu0 %v1355
    %2068 = vmatpush.bf16.msra.mxu0 %v1353
    %2069 = vmatpush.bf16.msra.mxu0 %v1351
    %2070 = vmatpush.bf16.msra.mxu0 %v1349
    %2071 = vmatpush.bf16.msra.mxu0 %v1347
    %2072 = vmatmul.bf16.gmra.mxu0 %v411
    %v2073 = vpop.f32.mrf.mxu0
    %v2074 = vadd.f32 %v2060, %v2073
    %v2075 = vpop.f32.mrf.mxu0
    %v2076 = vadd.f32 %v2062, %v2075
    %2077 = vdwg.mxu0
    %2078 = vmatpush.bf16.msra.mxu0 %v1377
    %2079 = vmatpush.bf16.msra.mxu0 %v1375
    %2080 = vmatpush.bf16.msra.mxu0 %v1373
    %2081 = vmatpush.bf16.msra.mxu0 %v1371
    %2082 = vmatpush.bf16.msra.mxu0 %v1369
    %2083 = vmatpush.bf16.msra.mxu0 %v1367
    %2084 = vmatpush.bf16.msra.mxu0 %v1365
    %2085 = vmatpush.bf16.msra.mxu0 %v1363
    %2086 = vmatmul.bf16.gmra.mxu0 %v412
    %v2087 = vpop.f32.mrf.mxu0
    %v2088 = vadd.f32 %v2074, %v2087
    %v2089 = vpop.f32.mrf.mxu0
    %v2090 = vadd.f32 %v2076, %v2089
    %2091 = vdwg.mxu0
    %2092 = vmatpush.bf16.msra.mxu0 %v1393
    %2093 = vmatpush.bf16.msra.mxu0 %v1391
    %2094 = vmatpush.bf16.msra.mxu0 %v1389
    %2095 = vmatpush.bf16.msra.mxu0 %v1387
    %2096 = vmatpush.bf16.msra.mxu0 %v1385
    %2097 = vmatpush.bf16.msra.mxu0 %v1383
    %2098 = vmatpush.bf16.msra.mxu0 %v1381
    %2099 = vmatpush.bf16.msra.mxu0 %v1379
    %2100 = vmatmul.bf16.gmra.mxu0 %v413
    %v2101 = vpop.f32.mrf.mxu0
    %v2102 = vadd.f32 %v2088, %v2101
    %v2103 = vpop.f32.mrf.mxu0
    %v2104 = vadd.f32 %v2090, %v2103
    %2105 = vdwg.mxu0
    %2106 = vmatpush.bf16.msra.mxu0 %v1409
    %2107 = vmatpush.bf16.msra.mxu0 %v1407
    %2108 = vmatpush.bf16.msra.mxu0 %v1405
    %2109 = vmatpush.bf16.msra.mxu0 %v1403
    %2110 = vmatpush.bf16.msra.mxu0 %v1401
    %2111 = vmatpush.bf16.msra.mxu0 %v1399
    %2112 = vmatpush.bf16.msra.mxu0 %v1397
    %2113 = vmatpush.bf16.msra.mxu0 %v1395
    %2114 = vmatmul.bf16.gmra.mxu0 %v414
    %v2115 = vpop.f32.mrf.mxu0
    %v2116 = vadd.f32 %v2102, %v2115
    %v2117 = vpop.f32.mrf.mxu0
    %v2118 = vadd.f32 %v2104, %v2117
    %2119 = vdwg.mxu0
    %2120 = vmatpush.bf16.msra.mxu0 %v1425
    %2121 = vmatpush.bf16.msra.mxu0 %v1423
    %2122 = vmatpush.bf16.msra.mxu0 %v1421
    %2123 = vmatpush.bf16.msra.mxu0 %v1419
    %2124 = vmatpush.bf16.msra.mxu0 %v1417
    %2125 = vmatpush.bf16.msra.mxu0 %v1415
    %2126 = vmatpush.bf16.msra.mxu0 %v1413
    %2127 = vmatpush.bf16.msra.mxu0 %v1411
    %2128 = vmatmul.bf16.gmra.mxu0 %v415
    %v2129 = vpop.f32.mrf.mxu0
    %v2130 = vadd.f32 %v2116, %v2129
    %v2131 = vpop.f32.mrf.mxu0
    %v2132 = vadd.f32 %v2118, %v2131
    %2133 = vdwg.mxu0
    %2134 = vmatpush.bf16.msra.mxu0 %v1441
    %2135 = vmatpush.bf16.msra.mxu0 %v1439
    %2136 = vmatpush.bf16.msra.mxu0 %v1437
    %2137 = vmatpush.bf16.msra.mxu0 %v1435
    %2138 = vmatpush.bf16.msra.mxu0 %v1433
    %2139 = vmatpush.bf16.msra.mxu0 %v1431
    %2140 = vmatpush.bf16.msra.mxu0 %v1429
    %2141 = vmatpush.bf16.msra.mxu0 %v1427
    %2142 = vmatmul.bf16.gmra.mxu0 %v416
    %v2143 = vpop.f32.mrf.mxu0
    %v2144 = vadd.f32 %v2130, %v2143
    %v2145 = vpop.f32.mrf.mxu0
    %v2146 = vadd.f32 %v2132, %v2145
    %2147 = vdwg.mxu0
    %2148 = vmatpush.bf16.msra.mxu0 %v1457
    %2149 = vmatpush.bf16.msra.mxu0 %v1455
    %2150 = vmatpush.bf16.msra.mxu0 %v1453
    %2151 = vmatpush.bf16.msra.mxu0 %v1451
    %2152 = vmatpush.bf16.msra.mxu0 %v1449
    %2153 = vmatpush.bf16.msra.mxu0 %v1447
    %2154 = vmatpush.bf16.msra.mxu0 %v1445
    %2155 = vmatpush.bf16.msra.mxu0 %v1443
    %2156 = vmatmul.bf16.gmra.mxu0 %v417
    %v2157 = vpop.f32.mrf.mxu0
    %v2158 = vadd.f32 %v2144, %v2157
    %v2159 = vpop.f32.mrf.mxu0
    %v2160 = vadd.f32 %v2146, %v2159
    %2161 = vdwg.mxu0
    %v2162 = vld [vmem:[#allocation7] sm:$0x3]
    %v2163 = vld [vmem:[%s3] sm:$0x3]
    %v2164 = vlaneseq
    %v2165 = vshrl.u32 %v2164, 7
    %v2166 = vadd.s32 %v2165, 8
    %vm2167 = vcmp.lt.s32.totalorder %v2165, 8
    %vm2168 = vcmp.lt.s32.totalorder %v2166, 8
    %v2169 = vsel %vm2167, %v1934, 0.0
    %v2170 = vsel %vm2167, %v2158, 0.0
    %v2171 = vsel %vm2168, %v1936, 0.0
    %v2172 = vsel %vm2168, %v2160, 0.0
    %v2173 = vadd.f32 %v2169, %v2171
    %v2174 = vrot.slane %v2173, 4
    %v2175 = vadd.f32 %v2173, %v2174
    %v2176 = vrot.slane %v2175, 2
    %v2177 = vadd.f32 %v2175, %v2176
    %v2178 = vrot.slane %v2177, 1
    %v2179 = vadd.f32 %v2177, %v2178
    %v2180 = vadd.f32 %v2170, %v2172
    %v2181 = vrot.slane %v2180, 4
    %v2182 = vadd.f32 %v2180, %v2181
    %v2183 = vrot.slane %v2182, 2
    %v2184 = vadd.f32 %v2182, %v2183
    %v2185 = vrot.slane %v2184, 1
    %v2186 = vadd.f32 %v2184, %v2185
    %v2187 = vmul.f32 %v2179, 0.125
    %v2188 = vmul.f32 %v2186, 0.125
    %v2189 = vsel %vm2167, 0.0, %v1934
    %v2190 = vsel %vm2167, 0.0, %v2158
    %v2191 = vsel %vm2168, 0.0, %v1936
    %v2192 = vsel %vm2168, 0.0, %v2160
    %v2193 = vadd.f32 %v2189, %v2191
    %v2194 = vrot.slane %v2193, 4
    %v2195 = vadd.f32 %v2193, %v2194
    %v2196 = vrot.slane %v2195, 2
    %v2197 = vadd.f32 %v2195, %v2196
    %v2198 = vrot.slane %v2197, 1
    %v2199 = vadd.f32 %v2197, %v2198
    %v2200 = vadd.f32 %v2190, %v2192
    %v2201 = vrot.slane %v2200, 4
    %v2202 = vadd.f32 %v2200, %v2201
    %v2203 = vrot.slane %v2202, 2
    %v2204 = vadd.f32 %v2202, %v2203
    %v2205 = vrot.slane %v2204, 1
    %v2206 = vadd.f32 %v2204, %v2205
    %v2207 = vmul.f32 %v2199, 0.125
    %v2208 = vmul.f32 %v2206, 0.125
    %v2209 = vsel %vm2167, %v2187, %v2207
    %v2210 = vsel %vm2167, %v2188, %v2208
    %v2211 = vsel %vm2168, %v2187, %v2207
    %v2212 = vsel %vm2168, %v2188, %v2208
    %v2213 = vsub.f32 %v1934, %v2209
    %v2214 = vsub.f32 %v2158, %v2210
    %v2215 = vsub.f32 %v1936, %v2211
    %v2216 = vsub.f32 %v2160, %v2212
    %v2217 = vmul.f32 %v2213, %v2213
    %v2218 = vmul.f32 %v2214, %v2214
    %v2219 = vmul.f32 %v2215, %v2215
    %v2220 = vmul.f32 %v2216, %v2216
    %v2221 = vsel %vm2167, %v2217, 0.0
    %v2222 = vsel %vm2167, %v2218, 0.0
    %v2223 = vsel %vm2168, %v2219, 0.0
    %v2224 = vsel %vm2168, %v2220, 0.0
    %v2225 = vadd.f32 %v2221, %v2223
    %v2226 = vrot.slane %v2225, 4
    %v2227 = vadd.f32 %v2225, %v2226
    %v2228 = vrot.slane %v2227, 2
    %v2229 = vadd.f32 %v2227, %v2228
    %v2230 = vrot.slane %v2229, 1
    %v2231 = vadd.f32 %v2229, %v2230
    %v2232 = vadd.f32 %v2222, %v2224
    %v2233 = vrot.slane %v2232, 4
    %v2234 = vadd.f32 %v2232, %v2233
    %v2235 = vrot.slane %v2234, 2
    %v2236 = vadd.f32 %v2234, %v2235
    %v2237 = vrot.slane %v2236, 1
    %v2238 = vadd.f32 %v2236, %v2237
    %v2239 = vmul.f32 %v2231, 0.125
    %v2240 = vmul.f32 %v2238, 0.125
    %v2241 = vsel %vm2167, 0.0, %v2217
    %v2242 = vsel %vm2167, 0.0, %v2218
    %v2243 = vsel %vm2168, 0.0, %v2219
    %v2244 = vsel %vm2168, 0.0, %v2220
    %v2245 = vadd.f32 %v2241, %v2243
    %v2246 = vrot.slane %v2245, 4
    %v2247 = vadd.f32 %v2245, %v2246
    %v2248 = vrot.slane %v2247, 2
    %v2249 = vadd.f32 %v2247, %v2248
    %v2250 = vrot.slane %v2249, 1
    %v2251 = vadd.f32 %v2249, %v2250
    %v2252 = vadd.f32 %v2242, %v2244
    %v2253 = vrot.slane %v2252, 4
    %v2254 = vadd.f32 %v2252, %v2253
    %v2255 = vrot.slane %v2254, 2
    %v2256 = vadd.f32 %v2254, %v2255
    %v2257 = vrot.slane %v2256, 1
    %v2258 = vadd.f32 %v2256, %v2257
    %v2259 = vmul.f32 %v2251, 0.125
    %v2260 = vmul.f32 %v2258, 0.125
    %v2261 = vsel %vm2167, %v2239, %v2259
    %v2262 = vsel %vm2167, %v2240, %v2260
    %v2263 = vsel %vm2168, %v2239, %v2259
    %v2264 = vsel %vm2168, %v2240, %v2260
    %v2265 = vadd.f32 %v2261, 1e-05
    %v2266 = vadd.f32 %v2262, 1e-05
    %v2267 = vadd.f32 %v2263, 1e-05
    %v2268 = vadd.f32 %v2264, 1e-05
    %v2269 = vrsqrt.pop %v2265
    %v2270 = vmul.f32 %v2269, %v2265
    %v2271 = vmul.f32 %v2270, %v2269
    %v2272 = vmul.f32 0.5, %v2271
    %v2273 = vsub.f32 1.5, %v2272
    %v2274 = vmul.f32 %v2269, %v2273
    %vm2275 = vweird.f32 %v2265
    %vm2276 = vweird.f32 %v2269
    %vm2277 = vmor %vm2275, %vm2276
    %v2278 = vsel %vm2277, %v2269, %v2274
    %v2279 = vrsqrt.pop %v2266
    %v2280 = vmul.f32 %v2279, %v2266
    %v2281 = vmul.f32 %v2280, %v2279
    %v2282 = vmul.f32 0.5, %v2281
    %v2283 = vsub.f32 1.5, %v2282
    %v2284 = vmul.f32 %v2279, %v2283
    %vm2285 = vweird.f32 %v2266
    %vm2286 = vweird.f32 %v2279
    %vm2287 = vmor %vm2285, %vm2286
    %v2288 = vsel %vm2287, %v2279, %v2284
    %v2289 = vrsqrt.pop %v2267
    %v2290 = vmul.f32 %v2289, %v2267
    %v2291 = vmul.f32 %v2290, %v2289
    %v2292 = vmul.f32 0.5, %v2291
    %v2293 = vsub.f32 1.5, %v2292
    %v2294 = vmul.f32 %v2289, %v2293
    %vm2295 = vweird.f32 %v2267
    %vm2296 = vweird.f32 %v2289
    %vm2297 = vmor %vm2295, %vm2296
    %v2298 = vsel %vm2297, %v2289, %v2294
    %v2299 = vrsqrt.pop %v2268
    %v2300 = vmul.f32 %v2299, %v2268
    %v2301 = vmul.f32 %v2300, %v2299
    %v2302 = vmul.f32 0.5, %v2301
    %v2303 = vsub.f32 1.5, %v2302
    %v2304 = vmul.f32 %v2299, %v2303
    %vm2305 = vweird.f32 %v2268
    %vm2306 = vweird.f32 %v2299
    %vm2307 = vmor %vm2305, %vm2306
    %v2308 = vsel %vm2307, %v2299, %v2304
    %v2309 = vmul.f32 %v2213, %v2278
    %v2310 = vmul.f32 %v2214, %v2288
    %v2311 = vmul.f32 %v2215, %v2298
    %v2312 = vmul.f32 %v2216, %v2308
    %v2314 = vperm.slane %v2162, 0
    %v2315 = vperm.slane %v2162, 1
    %v2318 = vmul.f32 %v2309, %v2314
    %v2319 = vmul.f32 %v2310, %v2315
    %v2320 = vmul.f32 %v2311, %v2314
    %v2321 = vmul.f32 %v2312, %v2315
    %v2323 = vperm.slane %v2163, 0
    %v2324 = vperm.slane %v2163, 1
    %v2327 = vadd.f32 %v2318, %v2323
    %v2328 = vadd.f32 %v2319, %v2324
    %v2329 = vadd.f32 %v2320, %v2323
    %v2330 = vadd.f32 %v2321, %v2324
    %v2331 = vmax.f32 %v2327, 0.0
    %v2332 = vmax.f32 %v2328, 0.0
    %v2333 = vmax.f32 %v2329, 0.0
    %v2334 = vmax.f32 %v2330, 0.0
    %v2335 = vpack.c.bf16 %v2333, %v2331
    %v2336 = vpack.c.bf16 %v2334, %v2332
    %v2337 = vld [vmem:[#allocation8] sm:$0xf]
    %v2338 = vld [vmem:[#allocation8 + $0x4] sm:$0xf]
    %v2339 = vld [vmem:[#allocation8 + $0x8] sm:$0xf]
    %v2340 = vld [vmem:[#allocation8 + $0xc] sm:$0xf]
    %v2341 = vld [vmem:[#allocation8 + $0x10] sm:$0xf]
    %v2342 = vld [vmem:[#allocation8 + $0x14] sm:$0xf]
    %v2343 = vld [vmem:[#allocation8 + $0x18] sm:$0xf]
    %v2344 = vld [vmem:[#allocation8 + $0x1c] sm:$0xf]
    %v2345 = vld [vmem:[#allocation8 + $0x20] sm:$0xf]
    %v2346 = vld [vmem:[#allocation8 + $0x24] sm:$0xf]
    %v2347 = vld [vmem:[#allocation8 + $0x28] sm:$0xf]
    %v2348 = vld [vmem:[#allocation8 + $0x2c] sm:$0xf]
    %v2349 = vld [vmem:[#allocation8 + $0x30] sm:$0xf]
    %v2350 = vld [vmem:[#allocation8 + $0x34] sm:$0xf]
    %v2351 = vld [vmem:[#allocation8 + $0x38] sm:$0xf]
    %v2352 = vld [vmem:[#allocation8 + $0x3c] sm:$0xf]
    %v2353 = vld [vmem:[#allocation8 + $0x40] sm:$0xf]
    %v2354 = vld [vmem:[#allocation8 + $0x44] sm:$0xf]
    %v2355 = vld [vmem:[#allocation8 + $0x48] sm:$0xf]
    %v2356 = vld [vmem:[#allocation8 + $0x4c] sm:$0xf]
    %v2357 = vld [vmem:[#allocation8 + $0x50] sm:$0xf]
    %v2358 = vld [vmem:[#allocation8 + $0x54] sm:$0xf]
    %v2359 = vld [vmem:[#allocation8 + $0x58] sm:$0xf]
    %v2360 = vld [vmem:[#allocation8 + $0x5c] sm:$0xf]
    %v2361 = vld [vmem:[#allocation8 + $0x60] sm:$0xf]
    %v2362 = vld [vmem:[#allocation8 + $0x64] sm:$0xf]
    %v2363 = vld [vmem:[#allocation8 + $0x68] sm:$0xf]
    %v2364 = vld [vmem:[#allocation8 + $0x6c] sm:$0xf]
    %v2365 = vld [vmem:[#allocation8 + $0x70] sm:$0xf]
    %v2366 = vld [vmem:[#allocation8 + $0x74] sm:$0xf]
    %v2367 = vld [vmem:[#allocation8 + $0x78] sm:$0xf]
    %v2368 = vld [vmem:[#allocation8 + $0x7c] sm:$0xf]
    %v2401 = vunpack.c.l.b16 %v2337
    %v2402 = vunpack.c.l.b16 %v2338
    %v2403 = vunpack.c.l.b16 %v2339
    %v2404 = vunpack.c.l.b16 %v2340
    %v2405 = vunpack.c.l.b16 %v2341
    %v2406 = vunpack.c.l.b16 %v2342
    %v2407 = vunpack.c.l.b16 %v2343
    %v2408 = vunpack.c.l.b16 %v2344
    %v2409 = vunpack.c.l.b16 %v2345
    %v2410 = vunpack.c.l.b16 %v2346
    %v2411 = vunpack.c.l.b16 %v2347
    %v2412 = vunpack.c.l.b16 %v2348
    %v2413 = vunpack.c.l.b16 %v2349
    %v2414 = vunpack.c.l.b16 %v2350
    %v2415 = vunpack.c.l.b16 %v2351
    %v2416 = vunpack.c.l.b16 %v2352
    %v2417 = vunpack.c.l.b16 %v2353
    %v2418 = vunpack.c.l.b16 %v2354
    %v2419 = vunpack.c.l.b16 %v2355
    %v2420 = vunpack.c.l.b16 %v2356
    %v2421 = vunpack.c.l.b16 %v2357
    %v2422 = vunpack.c.l.b16 %v2358
    %v2423 = vunpack.c.l.b16 %v2359
    %v2424 = vunpack.c.l.b16 %v2360
    %v2425 = vunpack.c.l.b16 %v2361
    %v2426 = vunpack.c.l.b16 %v2362
    %v2427 = vunpack.c.l.b16 %v2363
    %v2428 = vunpack.c.l.b16 %v2364
    %v2429 = vunpack.c.l.b16 %v2365
    %v2430 = vunpack.c.l.b16 %v2366
    %v2431 = vunpack.c.l.b16 %v2367
    %v2432 = vunpack.c.l.b16 %v2368
    %v2433 = vpack.c.b16 %v2402, %v2401
    %v2434 = vpack.c.b16 %v2404, %v2403
    %v2435 = vpack.c.b16 %v2406, %v2405
    %v2436 = vpack.c.b16 %v2408, %v2407
    %v2437 = vpack.c.b16 %v2410, %v2409
    %v2438 = vpack.c.b16 %v2412, %v2411
    %v2439 = vpack.c.b16 %v2414, %v2413
    %v2440 = vpack.c.b16 %v2416, %v2415
    %v2441 = vpack.c.b16 %v2418, %v2417
    %v2442 = vpack.c.b16 %v2420, %v2419
    %v2443 = vpack.c.b16 %v2422, %v2421
    %v2444 = vpack.c.b16 %v2424, %v2423
    %v2445 = vpack.c.b16 %v2426, %v2425
    %v2446 = vpack.c.b16 %v2428, %v2427
    %v2447 = vpack.c.b16 %v2430, %v2429
    %v2448 = vpack.c.b16 %v2432, %v2431
    %2465 = vmatpush.bf16.msra.mxu0 %v2440
    %2466 = vmatpush.bf16.msra.mxu0 %v2439
    %2467 = vmatpush.bf16.msra.mxu0 %v2438
    %2468 = vmatpush.bf16.msra.mxu0 %v2437
    %2469 = vmatpush.bf16.msra.mxu0 %v2436
    %2470 = vmatpush.bf16.msra.mxu0 %v2435
    %2471 = vmatpush.bf16.msra.mxu0 %v2434
    %2472 = vmatpush.bf16.msra.mxu0 %v2433
    %2473 = vmatmul.bf16.gmra.mxu0 %v2335
    %v2474 = vpop.f32.mrf.mxu0
    %v2475 = vadd.f32 0.0, %v2474
    %v2476 = vpop.f32.mrf.mxu0
    %v2477 = vadd.f32 0.0, %v2476
    %2478 = vdwg.mxu0
    %2479 = vmatpush.bf16.msra.mxu0 %v2448
    %2480 = vmatpush.bf16.msra.mxu0 %v2447
    %2481 = vmatpush.bf16.msra.mxu0 %v2446
    %2482 = vmatpush.bf16.msra.mxu0 %v2445
    %2483 = vmatpush.bf16.msra.mxu0 %v2444
    %2484 = vmatpush.bf16.msra.mxu0 %v2443
    %2485 = vmatpush.bf16.msra.mxu0 %v2442
    %2486 = vmatpush.bf16.msra.mxu0 %v2441
    %2487 = vmatmul.bf16.gmra.mxu0 %v2336
    %v2488 = vpop.f32.mrf.mxu0
    %v2489 = vadd.f32 %v2475, %v2488
    %v2490 = vpop.f32.mrf.mxu0
    %v2491 = vadd.f32 %v2477, %v2490
    %2492 = vdwg.mxu0
    %v2493 = vrot.slane %v2489, 4
    %v2494 = vadd.f32 %v2489, %v2493
    %v2495 = vrot.slane %v2494, 2
    %v2496 = vadd.f32 %v2494, %v2495
    %v2497 = vrot.slane %v2496, 1
    %v2498 = vadd.f32 %v2496, %v2497
    %v2499 = vrcp.pop 8.0
    %v2500 = vmul.f32 8.0, %v2499
    %v2501 = vsub.f32 1.0, %v2500
    %v2502 = vmul.f32 %v2499, %v2501
    %v2503 = vadd.f32 %v2499, %v2502
    %vm2504 = vweird.f32 %v2499
    %v2505 = vsel %vm2504, %v2499, %v2503
    %v2506 = vmul.f32 %v2498, %v2505
    %v2507 = vsub.f32 %v2489, %v2506
    %v2508 = vmul.f32 %v2507, %v2507
    %v2509 = vrot.slane %v2508, 4
    %v2510 = vadd.f32 %v2508, %v2509
    %v2511 = vrot.slane %v2510, 2
    %v2512 = vadd.f32 %v2510, %v2511
    %v2513 = vrot.slane %v2512, 1
    %v2514 = vadd.f32 %v2512, %v2513
    %v2515 = vmul.f32 %v2514, %v2505
    %v2516 = vadd.f32 %v2515, 1e-05
    %v2517 = vrsqrt.pop %v2516
    %v2518 = vmul.f32 %v2517, %v2516
    %v2519 = vmul.f32 %v2518, %v2517
    %v2520 = vmul.f32 0.5, %v2519
    %v2521 = vsub.f32 1.5, %v2520
    %v2522 = vmul.f32 %v2517, %v2521
    %vm2523 = vweird.f32 %v2516
    %vm2524 = vweird.f32 %v2517
    %vm2525 = vmor %vm2523, %vm2524
    %v2526 = vsel %vm2525, %v2517, %v2522
    %v2527 = vmul.f32 %v2507, %v2526
    %v2528 = vrot.slane %v2491, 4
    %v2529 = vadd.f32 %v2491, %v2528
    %v2530 = vrot.slane %v2529, 2
    %v2531 = vadd.f32 %v2529, %v2530
    %v2532 = vrot.slane %v2531, 1
    %v2533 = vadd.f32 %v2531, %v2532
    %v2534 = vmul.f32 %v2533, %v2505
    %v2535 = vsub.f32 %v2491, %v2534
    %v2536 = vmul.f32 %v2535, %v2535
    %v2537 = vrot.slane %v2536, 4
    %v2538 = vadd.f32 %v2536, %v2537
    %v2539 = vrot.slane %v2538, 2
    %v2540 = vadd.f32 %v2538, %v2539
    %v2541 = vrot.slane %v2540, 1
    %v2542 = vadd.f32 %v2540, %v2541
    %v2543 = vmul.f32 %v2542, %v2505
    %v2544 = vadd.f32 %v2543, 1e-05
    %v2545 = vrsqrt.pop %v2544
    %v2546 = vmul.f32 %v2545, %v2544
    %v2547 = vmul.f32 %v2546, %v2545
    %v2548 = vmul.f32 0.5, %v2547
    %v2549 = vsub.f32 1.5, %v2548
    %v2550 = vmul.f32 %v2545, %v2549
    %vm2551 = vweird.f32 %v2544
    %vm2552 = vweird.f32 %v2545
    %vm2553 = vmor %vm2551, %vm2552
    %v2554 = vsel %vm2553, %v2545, %v2550
    %v2555 = vmul.f32 %v2535, %v2554
    %2556 = vxpose.xlu0.b32.start [1/16] %v2527, 128
    %2557 = vxpose.xlu0.b32.cont [2/16] 0.0, 128
    %2558 = vxpose.xlu0.b32.cont [3/16] 0.0, 128
    %2559 = vxpose.xlu0.b32.cont [4/16] 0.0, 128
    %2560 = vxpose.xlu0.b32.cont [5/16] 0.0, 128
    %2561 = vxpose.xlu0.b32.cont [6/16] 0.0, 128
    %2562 = vxpose.xlu0.b32.cont [7/16] 0.0, 128
    %2563 = vxpose.xlu0.b32.cont [8/16] 0.0, 128
    %2564 = vxpose.xlu0.b32.cont [9/16] 0.0, 128
    %2565 = vxpose.xlu0.b32.cont [10/16] 0.0, 128
    %2566 = vxpose.xlu0.b32.cont [11/16] 0.0, 128
    %2567 = vxpose.xlu0.b32.cont [12/16] 0.0, 128
    %2568 = vxpose.xlu0.b32.cont [13/16] 0.0, 128
    %2569 = vxpose.xlu0.b32.cont [14/16] 0.0, 128
    %2570 = vxpose.xlu0.b32.cont [15/16] 0.0, 128
    %2571 = vxpose.xlu0.b32.end [16/16] 0.0, 128
    %v2572 = vpop.trf.xlu0
    %v2573 = vpop.trf.xlu0
    %v2574 = vpop.trf.xlu0
    %v2575 = vpop.trf.xlu0
    %v2576 = vpop.trf.xlu0
    %v2577 = vpop.trf.xlu0
    %v2578 = vpop.trf.xlu0
    %v2579 = vpop.trf.xlu0
    %v2580 = vpop.trf.xlu0
    %v2581 = vpop.trf.xlu0
    %v2582 = vpop.trf.xlu0
    %v2583 = vpop.trf.xlu0
    %v2584 = vpop.trf.xlu0
    %v2585 = vpop.trf.xlu0
    %v2586 = vpop.trf.xlu0
    %v2587 = vpop.trf.xlu0
    %vm2588 = vcmask 64512
    %v2590 = vsel %vm2588, %v2572, 0
    %v2593 = vsel %vm2588, %v2573, 0
    %v2596 = vsel %vm2588, %v2574, 0
    %v2599 = vsel %vm2588, %v2575, 0
    %v2602 = vsel %vm2588, %v2576, 0
    %v2605 = vsel %vm2588, %v2577, 0
    %v2608 = vsel %vm2588, %v2578, 0
    %v2611 = vsel %vm2588, %v2579, 0
    %v2614 = vsel %vm2588, %v2580, 0
    %v2617 = vsel %vm2588, %v2581, 0
    %v2620 = vsel %vm2588, %v2582, 0
    %v2623 = vsel %vm2588, %v2583, 0
    %v2626 = vsel %vm2588, %v2584, 0
    %v2629 = vsel %vm2588, %v2585, 0
    %v2632 = vsel %vm2588, %v2586, 0
    %v2635 = vsel %vm2588, %v2587, 0
    %2637 = vmatpush.msra.mxu0 0.0
    %2638 = vmatpush.msra.mxu0 0.0
    %2639 = vmatpush.msra.mxu0 0.0
    %2640 = vmatpush.msra.mxu0 0.0
    %2641 = vmatpush.msra.mxu0 0.0
    %2642 = vmatpush.msra.mxu0 0.0
    %2643 = vmatpush.msra.mxu0 0.0
    %2644 = vmatpush.msra.mxu0 0.0
    %2645 = vmatpush.msra.mxu0 0.0
    %2646 = vmatpush.msra.mxu0 0.0
    %2647 = vmatpush.msra.mxu0 0.0
    %2648 = vmatpush.msra.mxu0 0.0
    %2649 = vmatpush.msra.mxu0 0.0
    %2650 = vmatpush.msra.mxu0 0.0
    %2651 = vmatpush.msra.mxu0 0.0
    %2652 = vmatpush.msra.mxu0 %v2555
    %2653 = vmatmul.f32.gmra.mxu0 %v2590
    %v2654 = vpop.f32.mrf.mxu0
    %v2655 = vadd.f32 0.0, %v2654
    %2656 = vmatmul.f32.gmra.mxu0 %v2593
    %v2657 = vpop.f32.mrf.mxu0
    %v2658 = vadd.f32 0.0, %v2657
    %2659 = vmatmul.f32.gmra.mxu0 %v2596
    %v2660 = vpop.f32.mrf.mxu0
    %v2661 = vadd.f32 0.0, %v2660
    %2662 = vmatmul.f32.gmra.mxu0 %v2599
    %v2663 = vpop.f32.mrf.mxu0
    %v2664 = vadd.f32 0.0, %v2663
    %2665 = vmatmul.f32.gmra.mxu0 %v2602
    %v2666 = vpop.f32.mrf.mxu0
    %v2667 = vadd.f32 0.0, %v2666
    %2668 = vmatmul.f32.gmra.mxu0 %v2605
    %v2669 = vpop.f32.mrf.mxu0
    %v2670 = vadd.f32 0.0, %v2669
    %2671 = vmatmul.f32.gmra.mxu0 %v2608
    %v2672 = vpop.f32.mrf.mxu0
    %v2673 = vadd.f32 0.0, %v2672
    %2674 = vmatmul.f32.gmra.mxu0 %v2611
    %v2675 = vpop.f32.mrf.mxu0
    %v2676 = vadd.f32 0.0, %v2675
    %2677 = vmatmul.f32.gmra.mxu0 %v2614
    %v2678 = vpop.f32.mrf.mxu0
    %v2679 = vadd.f32 0.0, %v2678
    %2680 = vmatmul.f32.gmra.mxu0 %v2617
    %v2681 = vpop.f32.mrf.mxu0
    %v2682 = vadd.f32 0.0, %v2681
    %2683 = vmatmul.f32.gmra.mxu0 %v2620
    %v2684 = vpop.f32.mrf.mxu0
    %v2685 = vadd.f32 0.0, %v2684
    %2686 = vmatmul.f32.gmra.mxu0 %v2623
    %v2687 = vpop.f32.mrf.mxu0
    %v2688 = vadd.f32 0.0, %v2687
    %2689 = vmatmul.f32.gmra.mxu0 %v2626
    %v2690 = vpop.f32.mrf.mxu0
    %v2691 = vadd.f32 0.0, %v2690
    %2692 = vmatmul.f32.gmra.mxu0 %v2629
    %v2693 = vpop.f32.mrf.mxu0
    %v2694 = vadd.f32 0.0, %v2693
    %2695 = vmatmul.f32.gmra.mxu0 %v2632
    %v2696 = vpop.f32.mrf.mxu0
    %v2697 = vadd.f32 0.0, %v2696
    %2698 = vmatmul.f32.gmra.mxu0 %v2635
    %v2699 = vpop.f32.mrf.mxu0
    %v2700 = vadd.f32 0.0, %v2699
    %2701 = vdwg.mxu0
    %v2702 = vmul.f32 %v2655, 0.125
    %v2703 = vmul.f32 %v2658, 0.125
    %v2704 = vmul.f32 %v2661, 0.125
    %v2705 = vmul.f32 %v2664, 0.125
    %v2706 = vmul.f32 %v2667, 0.125
    %v2707 = vmul.f32 %v2670, 0.125
    %v2708 = vmul.f32 %v2673, 0.125
    %v2709 = vmul.f32 %v2676, 0.125
    %v2710 = vmul.f32 %v2679, 0.125
    %v2711 = vmul.f32 %v2682, 0.125
    %v2712 = vmul.f32 %v2685, 0.125
    %v2713 = vmul.f32 %v2688, 0.125
    %v2714 = vmul.f32 %v2691, 0.125
    %v2715 = vmul.f32 %v2694, 0.125
    %v2716 = vmul.f32 %v2697, 0.125
    %v2717 = vmul.f32 %v2700, 0.125
    %v2718 = vadd.s32 %v2165, 16
    %v2719 = vadd.s32 %v2165, 24
    %v2720 = vadd.s32 %v2165, 32
    %v2721 = vadd.s32 %v2165, 40
    %v2722 = vadd.s32 %v2165, 48
    %v2723 = vadd.s32 %v2165, 56
    %v2724 = vadd.s32 %v2165, 64
    %v2725 = vadd.s32 %v2165, 72
    %v2726 = vadd.s32 %v2165, 80
    %v2727 = vadd.s32 %v2165, 88
    %v2728 = vadd.s32 %v2165, 96
    %v2729 = vadd.s32 %v2165, 104
    %v2730 = vadd.s32 %v2165, 112
    %v2731 = vadd.s32 %v2165, 120
    %v2732 = vlaneseq
    %v2733 = vand.u32 %v2732, 127
    %vm2734 = vcmp.eq.s32.totalorder %v2165, %v2733
    %vm2735 = vcmp.eq.s32.totalorder %v2166, %v2733
    %vm2736 = vcmp.eq.s32.totalorder %v2718, %v2733
    %vm2737 = vcmp.eq.s32.totalorder %v2719, %v2733
    %vm2738 = vcmp.eq.s32.totalorder %v2720, %v2733
    %vm2739 = vcmp.eq.s32.totalorder %v2721, %v2733
    %vm2740 = vcmp.eq.s32.totalorder %v2722, %v2733
    %vm2741 = vcmp.eq.s32.totalorder %v2723, %v2733
    %vm2742 = vcmp.eq.s32.totalorder %v2724, %v2733
    %vm2743 = vcmp.eq.s32.totalorder %v2725, %v2733
    %vm2744 = vcmp.eq.s32.totalorder %v2726, %v2733
    %vm2745 = vcmp.eq.s32.totalorder %v2727, %v2733
    %vm2746 = vcmp.eq.s32.totalorder %v2728, %v2733
    %vm2747 = vcmp.eq.s32.totalorder %v2729, %v2733
    %vm2748 = vcmp.eq.s32.totalorder %v2730, %v2733
    %vm2749 = vcmp.eq.s32.totalorder %v2731, %v2733
    %v2750 = vsub.f32 %v2702, 1.0
    %v2751 = vsub.f32 %v2703, 1.0
    %v2752 = vsub.f32 %v2704, 1.0
    %v2753 = vsub.f32 %v2705, 1.0
    %v2754 = vsub.f32 %v2706, 1.0
    %v2755 = vsub.f32 %v2707, 1.0
    %v2756 = vsub.f32 %v2708, 1.0
    %v2757 = vsub.f32 %v2709, 1.0
    %v2758 = vsub.f32 %v2710, 1.0
    %v2759 = vsub.f32 %v2711, 1.0
    %v2760 = vsub.f32 %v2712, 1.0
    %v2761 = vsub.f32 %v2713, 1.0
    %v2762 = vsub.f32 %v2714, 1.0
    %v2763 = vsub.f32 %v2715, 1.0
    %v2764 = vsub.f32 %v2716, 1.0
    %v2765 = vsub.f32 %v2717, 1.0
    %v2766 = vmul.f32 %v2750, %v2750
    %v2767 = vmul.f32 %v2751, %v2751
    %v2768 = vmul.f32 %v2752, %v2752
    %v2769 = vmul.f32 %v2753, %v2753
    %v2770 = vmul.f32 %v2754, %v2754
    %v2771 = vmul.f32 %v2755, %v2755
    %v2772 = vmul.f32 %v2756, %v2756
    %v2773 = vmul.f32 %v2757, %v2757
    %v2774 = vmul.f32 %v2758, %v2758
    %v2775 = vmul.f32 %v2759, %v2759
    %v2776 = vmul.f32 %v2760, %v2760
    %v2777 = vmul.f32 %v2761, %v2761
    %v2778 = vmul.f32 %v2762, %v2762
    %v2779 = vmul.f32 %v2763, %v2763
    %v2780 = vmul.f32 %v2764, %v2764
    %v2781 = vmul.f32 %v2765, %v2765
    %v2782 = vsel %vm2734, %v2766, 0.0
    %v2783 = vsel %vm2735, %v2767, 0.0
    %v2784 = vsel %vm2736, %v2768, 0.0
    %v2785 = vsel %vm2737, %v2769, 0.0
    %v2786 = vsel %vm2738, %v2770, 0.0
    %v2787 = vsel %vm2739, %v2771, 0.0
    %v2788 = vsel %vm2740, %v2772, 0.0
    %v2789 = vsel %vm2741, %v2773, 0.0
    %v2790 = vsel %vm2742, %v2774, 0.0
    %v2791 = vsel %vm2743, %v2775, 0.0
    %v2792 = vsel %vm2744, %v2776, 0.0
    %v2793 = vsel %vm2745, %v2777, 0.0
    %v2794 = vsel %vm2746, %v2778, 0.0
    %v2795 = vsel %vm2747, %v2779, 0.0
    %v2796 = vsel %vm2748, %v2780, 0.0
    %v2797 = vsel %vm2749, %v2781, 0.0
    %v2798 = vadd.f32 %v2782, %v2783
    %v2799 = vadd.f32 %v2798, %v2784
    %v2800 = vadd.f32 %v2799, %v2785
    %v2801 = vadd.f32 %v2800, %v2786
    %v2802 = vadd.f32 %v2801, %v2787
    %v2803 = vadd.f32 %v2802, %v2788
    %v2804 = vadd.f32 %v2803, %v2789
    %v2805 = vadd.f32 %v2804, %v2790
    %v2806 = vadd.f32 %v2805, %v2791
    %v2807 = vadd.f32 %v2806, %v2792
    %v2808 = vadd.f32 %v2807, %v2793
    %v2809 = vadd.f32 %v2808, %v2794
    %v2810 = vadd.f32 %v2809, %v2795
    %v2811 = vadd.f32 %v2810, %v2796
    %v2812 = vadd.f32 %v2811, %v2797
    %2813 = vadd.xlane.f32.xlu0 %v2812
    %v2814 = vpop.xlane.xlu0 %2813
    %v2815 = vrot.slane %v2814, 4
    %v2816 = vadd.f32 %v2814, %v2815
    %v2817 = vrot.slane %v2816, 2
    %v2818 = vadd.f32 %v2816, %v2817
    %v2819 = vrot.slane %v2818, 1
    %v2820 = vadd.f32 %v2818, %v2819
    %s2821 = vtos %v2820
    %v2822 = vmul.f32 %v2702, %v2702
    %v2823 = vmul.f32 %v2703, %v2703
    %v2824 = vmul.f32 %v2704, %v2704
    %v2825 = vmul.f32 %v2705, %v2705
    %v2826 = vmul.f32 %v2706, %v2706
    %v2827 = vmul.f32 %v2707, %v2707
    %v2828 = vmul.f32 %v2708, %v2708
    %v2829 = vmul.f32 %v2709, %v2709
    %v2830 = vmul.f32 %v2710, %v2710
    %v2831 = vmul.f32 %v2711, %v2711
    %v2832 = vmul.f32 %v2712, %v2712
    %v2833 = vmul.f32 %v2713, %v2713
    %v2834 = vmul.f32 %v2714, %v2714
    %v2835 = vmul.f32 %v2715, %v2715
    %v2836 = vmul.f32 %v2716, %v2716
    %v2837 = vmul.f32 %v2717, %v2717
    %v2838 = vsel %vm2734, 0.0, %v2822
    %v2839 = vsel %vm2735, 0.0, %v2823
    %v2840 = vsel %vm2736, 0.0, %v2824
    %v2841 = vsel %vm2737, 0.0, %v2825
    %v2842 = vsel %vm2738, 0.0, %v2826
    %v2843 = vsel %vm2739, 0.0, %v2827
    %v2844 = vsel %vm2740, 0.0, %v2828
    %v2845 = vsel %vm2741, 0.0, %v2829
    %v2846 = vsel %vm2742, 0.0, %v2830
    %v2847 = vsel %vm2743, 0.0, %v2831
    %v2848 = vsel %vm2744, 0.0, %v2832
    %v2849 = vsel %vm2745, 0.0, %v2833
    %v2850 = vsel %vm2746, 0.0, %v2834
    %v2851 = vsel %vm2747, 0.0, %v2835
    %v2852 = vsel %vm2748, 0.0, %v2836
    %v2853 = vsel %vm2749, 0.0, %v2837
    %v2854 = vadd.f32 %v2838, %v2839
    %v2855 = vadd.f32 %v2854, %v2840
    %v2856 = vadd.f32 %v2855, %v2841
    %v2857 = vadd.f32 %v2856, %v2842
    %v2858 = vadd.f32 %v2857, %v2843
    %v2859 = vadd.f32 %v2858, %v2844
    %v2860 = vadd.f32 %v2859, %v2845
    %v2861 = vadd.f32 %v2860, %v2846
    %v2862 = vadd.f32 %v2861, %v2847
    %v2863 = vadd.f32 %v2862, %v2848
    %v2864 = vadd.f32 %v2863, %v2849
    %v2865 = vadd.f32 %v2864, %v2850
    %v2866 = vadd.f32 %v2865, %v2851
    %v2867 = vadd.f32 %v2866, %v2852
    %v2868 = vadd.f32 %v2867, %v2853
    %2869 = vadd.xlane.f32.xlu0 %v2868
    %v2870 = vpop.xlane.xlu0 %2869
    %v2871 = vrot.slane %v2870, 4
    %v2872 = vadd.f32 %v2870, %v2871
    %v2873 = vrot.slane %v2872, 2
    %v2874 = vadd.f32 %v2872, %v2873
    %v2875 = vrot.slane %v2874, 1
    %v2876 = vadd.f32 %v2874, %v2875
    %s2877 = vtos %v2876
    %s2878 = smul.f32 %s2877, 0.0051
    %s2879 = sadd.f32 %s2821, %s2878
    %v2880 = vstv %s2879
    %v2881 = vadd.f32 %v2880, 0.0
    %vm2882 = vcmask 0
    %2883 = vst.msk [vmem:[#allocation10] sm:$0x1] %vm2882, %v2881
    // Predicated region
    $region38: #{tpu_custom_call.1} parent=1 // pred_check
      _
    $region39: #{tpu_custom_call.1} parent=1 // pred_check_branch
      %2885 = sbr.rel (0) target = $region41
    $region40: #{tpu_custom_call.1} parent=1 // pred_region
      %2887 = vsyncadd [#allocation4], 0
      %s2889 = sshll.u32 [#allocation10], 4
      %s2890 = int_to_ptr.vmem [resolvable:$true] %s2889
      %s2891 = sshll.u32 %s5, 4
      %s2892 = int_to_ptr.hbm [resolvable:$true] %s2891
      %2894 = dma.vmem_to_hbm [thread:$0]  %s2890, 16, %s2892, [#allocation4]
    $region41: #{tpu_custom_call.1} parent=1 // pred_fallthru
      _
    // Predicated region
    $region42: #{tpu_custom_call.1} parent=1 // pred_check
      _
    $region43: #{tpu_custom_call.1} parent=1 // pred_check_branch
      %2896 = sbr.rel (0) target = $region45
    $region44: #{tpu_custom_call.1} parent=1 // pred_region
      %2898 = dma.done [#allocation4], 16
    $region45: #{tpu_custom_call.1} parent=1 // pred_fallthru
      _
    %2899 = vsyncpa [#allocation3], 1
    %2900 = vsyncpa [#allocation6], 1
    %2901 = vsyncpa [#allocation9], 1
    %2902 = vsyncpa [#allocation4], 1

</llo_original>
